<compile_context>
chip_gen: v6e
topology: v6e:2x2x1
jax: 0.10.0
libtpu: 0.0.40
codegen_flags: <defaults>
</compile_context>

<pallas_src>
import functools

import jax
import jax.numpy as jnp
from jax.experimental import pallas as pl
from jax.experimental.pallas import tpu as pltpu

LANE = 128                    # channel dims padded to multiples of the lane width
MM_DTYPE = jnp.bfloat16       # operand dtype for the large matmuls (f32 accumulate)


def _swish(v):
    return v * jax.nn.sigmoid(v)


# --------------------------- shared in-kernel block -------------------------

def _front_block(xc, tile_idx, ws_ref, bs_ref, we_ref, be_ref, wd_ref, bd_ref,
                 *, tile_l, l_valid):
    """stem(k=3)+Swish -> expand 1x1+Swish -> depthwise(k=3)+Swish for one
    (batch, tile) grid step.

    xc: (tile_l+2, 3*Cin) pre-built im2col rows (f32).
    Returns (h_center (tile_l, C0p) : stem output (residual input),
             d        (tile_l, Cmidp): depthwise output)."""
    # stem conv: the three k=3 taps fused into a single K=3*Cin matmul (f32; K tiny).
    hp = jnp.dot(xc, ws_ref[...], preferred_element_type=jnp.float32) + bs_ref[...]
    h_ext = _swish(hp)                                    # (tile_l+2, C0p)

    # expand 1x1 + Swish (bf16 operands, f32 accumulate; weights pre-cast in wrapper).
    ep = jnp.dot(h_ext.astype(MM_DTYPE), we_ref[...],
                 preferred_element_type=jnp.float32) + be_ref[...]
    e_ext = _swish(ep)                                    # (tile_l+2, Cmidp)

    # zero halo rows outside [0, L): the depthwise conv uses zero 'same'
    # padding, and halo / tail rows would otherwise hold swish(bias) values.
    gpos = (tile_idx * tile_l - 1
            + jax.lax.broadcasted_iota(jnp.int32, (tile_l + 2, 1), 0))
    e_ext = jnp.where((gpos >= 0) & (gpos < l_valid), e_ext, 0.0)

    # depthwise conv1d k=3 'same' + Swish
    dp = (e_ext[0:tile_l, :] * wd_ref[0:1, :]
          + e_ext[1:tile_l + 1, :] * wd_ref[1:2, :]
          + e_ext[2:tile_l + 2, :] * wd_ref[2:3, :]) + bd_ref[...]
    d = _swish(dp)                                        # (tile_l, Cmidp)

    return h_ext[1:tile_l + 1, :], d


# ------------------------------- kernels ------------------------------------

def _se_sum_kernel(xc_ref, ws_ref, bs_ref, we_ref, be_ref, wd_ref, bd_ref,
                   se_ref, *, tile_l, l_valid, mask_tail):
    """Pass 1: per-(tile,batch) channel sums of the depthwise output (SE mean)."""
    i = pl.program_id(1)
    xc = xc_ref[0, 0]                                     # (tile_l+2, 3*Cin)
    _, d = _front_block(xc, i, ws_ref, bs_ref, we_ref, be_ref, wd_ref, bd_ref,
                        tile_l=tile_l, l_valid=l_valid)
    if mask_tail:   # static: only emitted when L was padded up to a tile multiple
        cpos = i * tile_l + jax.lax.broadcasted_iota(jnp.int32, (tile_l, 1), 0)
        d = jnp.where(cpos < l_valid, d, 0.0)
    se_ref[0, 0] = jnp.sum(d, axis=0, keepdims=True)      # one dense store


def _finish_kernel(xc_ref, ws_ref, bs_ref, we_ref, be_ref, wd_ref, bd_ref,
                   gate_ref, wp_ref, bp_ref, wh_ref, bh_ref,
                   gap_ref, *, tile_l, l_valid, mask_tail):
    """Pass 2: SE gate + project(+residual) + head + per-tile GAP partials."""
    i = pl.program_id(1)
    xc = xc_ref[0, 0]
    h_c, d = _front_block(xc, i, ws_ref, bs_ref, we_ref, be_ref, wd_ref, bd_ref,
                          tile_l=tile_l, l_valid=l_valid)
    sg = d * gate_ref[0]                                  # SE rescale, (tile_l, Cmidp)
    # project 1x1 (linear) + residual with the stem output
    y = jnp.dot(sg.astype(MM_DTYPE), wp_ref[...],
                preferred_element_type=jnp.float32) + bp_ref[...] + h_c
    # head 1x1 + Swish
    hd = _swish(jnp.dot(y.astype(MM_DTYPE), wh_ref[...],
                        preferred_element_type=jnp.float32) + bh_ref[...])
    if mask_tail:
        cpos = i * tile_l + jax.lax.broadcasted_iota(jnp.int32, (tile_l, 1), 0)
        hd = jnp.where(cpos < l_valid, hd, 0.0)
    gap_ref[0, 0] = jnp.sum(hd, axis=0, keepdims=True)    # one dense store


# ------------------------------- wrapper -------------------------------------

def _pad_to(a, axis, mult):
    pad = (-a.shape[axis]) % mult
    if pad == 0:
        return a
    widths = [(0, 0)] * a.ndim
    widths[axis] = (0, pad)
    return jnp.pad(a, widths)


def _resident(shape):
    """BlockSpec keeping a (small) array fully resident in VMEM across the grid."""
    nd = len(shape)
    return pl.BlockSpec(shape, lambda n, i, _nd=nd: (0,) * _nd)


def _pick_tile(length):
    # Long signals: big fixed tiles (amortize ~0.35us/step, long MXU M streams).
    # Short signals: aim for ~2 tiles (keeps both v7x TensorCores busy), rounded
    # to a multiple of 8 sublanes; L is padded up to a tile multiple.
    if length >= 2048:
        return 1024
    return max(8, ((((length + 1) // 2) + 7) // 8) * 8)


def efficientnet_forward(x_ncl, params, tile_l=None):
    """x_ncl: (N, C_in, L) float32 in PyTorch Conv1d layout.

    params (BatchNorm already folded into conv weight/bias):
      w_stem (3, Cin, C0)  = torch Conv1d weight (C0, Cin, 3).permute(2, 1, 0)
      b_stem (C0,)
      w_exp  (C0, Cmid),  b_exp (Cmid,)
      w_dw   (3, Cmid)     = torch depthwise weight (Cmid, 1, 3).squeeze(1).T
      b_dw   (Cmid,)
      w_se1  (Cmid, Cse), b_se1 (Cse,)
      w_se2  (Cse, Cmid), b_se2 (Cmid,)
      w_prj  (Cmid, C0),  b_prj (C0,)     (residual requires Cout == C0)
      w_head (C0, Chead), b_head (Chead,)

    Returns globally average-pooled features (N, Chead), float32.
    """
    (w_stem, b_stem, w_exp, b_exp, w_dw, b_dw,
     w_se1, b_se1, w_se2, b_se2, w_prj, b_prj, w_head, b_head) = params

    n_batch, c_in, l_seq = x_ncl.shape
    c0, c_mid = w_exp.shape
    c_head = w_head.shape[1]
    assert w_stem.shape == (3, c_in, c0), "stem weight must be (3, Cin, C0)"
    assert w_prj.shape[1] == c0, "MBConv residual requires Cout == C0"

    if tile_l is None:
        tile_l = _pick_tile(l_seq)
    num_tiles = -(-l_seq // tile_l)
    l_pad = num_tiles * tile_l
    mask_tail = (l_pad != l_seq)

    f32 = jnp.float32
    # Pad channel dims to multiples of 128 lanes; zero padding keeps padded
    # channels exactly 0 through swish / depthwise / residual.
    c0p = c0 + (-c0) % LANE
    cmidp = c_mid + (-c_mid) % LANE
    cheadp = c_head + (-c_head) % LANE

    # Weights: stem flattened to the fused-K layout; big matmul weights pre-cast
    # to bf16 ONCE here (no per-tile casts, half the weight VMEM residency).
    ws = _pad_to(w_stem.astype(f32).reshape(3 * c_in, c0), 1, LANE)          # (3Cin, C0p)
    bs = _pad_to(b_stem.astype(f32)[None, :], 1, LANE)                       # (1, C0p)
    we = _pad_to(_pad_to(w_exp.astype(f32), 0, LANE), 1, LANE).astype(MM_DTYPE)
    be = _pad_to(b_exp.astype(f32)[None, :], 1, LANE)                        # (1, Cmidp)
    wd = _pad_to(w_dw.astype(f32), 1, LANE)                                  # (3, Cmidp)
    bd = _pad_to(b_dw.astype(f32)[None, :], 1, LANE)                         # (1, Cmidp)
    wp = _pad_to(_pad_to(w_prj.astype(f32), 0, LANE), 1, LANE).astype(MM_DTYPE)
    bp = _pad_to(b_prj.astype(f32)[None, :], 1, LANE)                        # (1, C0p)
    wh = _pad_to(_pad_to(w_head.astype(f32), 0, LANE), 1, LANE).astype(MM_DTYPE)
    bh = _pad_to(b_head.astype(f32)[None, :], 1, LANE)                       # (1, Cheadp)

    # Per-tile im2col windows of the raw input: x_cat[i, n, r, t*Cin+c] =
    # x[n, i*tile_l + r + t - 2, c] (zeros outside [0, L)). Only ~3x duplication
    # of the tiny Cin-channel input, and it keeps the kernels' VMEM footprint
    # O(tile) instead of O(N*L) (the previous fully-resident input).
    x = jnp.transpose(x_ncl.astype(f32), (0, 2, 1))                          # (N, L, Cin)
    x = jnp.pad(x, ((0, 0), (2, l_pad - l_seq + 2), (0, 0)))                 # (N, l_pad+4, Cin)
    wins = jnp.stack([x[:, i * tile_l:i * tile_l + tile_l + 4, :]
                      for i in range(num_tiles)], axis=0)                    # (T, N, tile_l+4, Cin)
    x_cat = jnp.concatenate([wins[:, :, t:t + tile_l + 2, :] for t in range(3)],
                            axis=-1)                                         # (T, N, tile_l+2, 3Cin)

    front_specs = [
        pl.BlockSpec((1, 1, tile_l + 2, 3 * c_in), lambda n, i: (i, n, 0, 0)),
        _resident((3 * c_in, c0p)),
        _resident((1, c0p)),
        _resident((c0p, cmidp)),
        _resident((1, cmidp)),
        _resident((3, cmidp)),
        _resident((1, cmidp)),
    ]
    front_args = (x_cat, ws, bs, we, be, wd, bd)
    cparams = pltpu.CompilerParams(
        dimension_semantics=("parallel", "parallel"),
        vmem_limit_bytes=32 * 1024 * 1024)

    # ---- pass 1: per-(tile, batch) SE channel sums ---------------------------
    se_partials = pl.pallas_call(
        functools.partial(_se_sum_kernel, tile_l=tile_l, l_valid=l_seq,
                          mask_tail=mask_tail),
        out_shape=jax.ShapeDtypeStruct((num_tiles, n_batch, 1, cmidp), f32),
        grid=(n_batch, num_tiles),
        in_specs=front_specs,
        out_specs=pl.BlockSpec((1, 1, 1, cmidp), lambda n, i: (i, n, 0, 0)),
        compiler_params=cparams,
    )(*front_args)

    se_mean = jnp.sum(se_partials, axis=0)[:, 0, :] * (1.0 / l_seq)          # (N, Cmidp)

    # Squeeze-excite gate: grid-invariant tiny matmuls, computed once here
    # (previously recomputed per tile inside pass 2).
    s = se_mean[:, :c_mid]
    t1 = s @ w_se1.astype(f32) + b_se1.astype(f32)
    t1 = t1 * jax.nn.sigmoid(t1)
    gate = jax.nn.sigmoid(t1 @ w_se2.astype(f32) + b_se2.astype(f32))        # (N, Cmid)
    gate_p = _pad_to(gate, 1, LANE).reshape(n_batch, 1, cmidp)               # (N, 1, Cmidp)

    # ---- pass 2: gate + project(+residual) + head + GAP partials -------------
    gap_partials = pl.pallas_call(
        functools.partial(_finish_kernel, tile_l=tile_l, l_valid=l_seq,
                          mask_tail=mask_tail),
        out_shape=jax.ShapeDtypeStruct((num_tiles, n_batch, 1, cheadp), f32),
        grid=(n_batch, num_tiles),
        in_specs=front_specs + [
            pl.BlockSpec((1, 1, cmidp), lambda n, i: (n, 0, 0)),   # gate
            _resident((cmidp, c0p)), _resident((1, c0p)),
            _resident((c0p, cheadp)), _resident((1, cheadp)),
        ],
        out_specs=pl.BlockSpec((1, 1, 1, cheadp), lambda n, i: (i, n, 0, 0)),
        compiler_params=cparams,
    )(*front_args, gate_p, wp, bp, wh, bh)

    pooled = jnp.sum(gap_partials, axis=0)[:, 0, :] * (1.0 / l_seq)          # (N, Cheadp)
    return pooled[:, :c_head]


# ------------------------- pure-JAX reference --------------------------------

def _reference_forward(x_ncl, params):
    (w_stem, b_stem, w_exp, b_exp, w_dw, b_dw,
     w_se1, b_se1, w_se2, b_se2, w_prj, b_prj, w_head, b_head) = params
    x = jnp.transpose(x_ncl, (0, 2, 1)).astype(jnp.float32)          # (N, L, Cin)
    _, l, _ = x.shape
    sw = lambda v: v * jax.nn.sigmoid(v)
    xp = jnp.pad(x, ((0, 0), (1, 1), (0, 0)))
    h = sum(jnp.einsum("nlc,cd->nld", xp[:, t:t + l, :], w_stem[t])
            for t in range(3)) + b_stem
    h = sw(h)
    e = sw(jnp.einsum("nlc,cd->nld", h, w_exp) + b_exp)
    ep = jnp.pad(e, ((0, 0), (1, 1), (0, 0)))
    d = sw(sum(ep[:, t:t + l, :] * w_dw[t] for t in range(3)) + b_dw)
    s = jnp.mean(d, axis=1)
    t1 = sw(s @ w_se1 + b_se1)
    g = jax.nn.sigmoid(t1 @ w_se2 + b_se2)
    y = jnp.einsum("nlc,cd->nld", d * g[:, None, :], w_prj) + b_prj + h
    hd = sw(jnp.einsum("nlc,cd->nld", y, w_head) + b_head)
    return jnp.mean(hd, axis=1)


# --------------------------------- main ---------------------------------------

if __name__ == "__main__":
    key = jax.random.PRNGKey(0)
    n_batch, c_in, l_seq = 2, 4, 64
    c0, expansion, se_div, c_head = 16, 4, 4, 32
    c_mid = c0 * expansion     # 64
    c_se = c_mid // se_div     # 16

    keys = jax.random.split(key, 16)

    def init(k, shape, fan_in):
        return (jax.random.normal(k, shape, jnp.float32)
                * (1.0 / jnp.sqrt(jnp.float32(fan_in))))

    def bias(k, n):
        return 0.05 * jax.random.normal(k, (n,), jnp.float32)

    x = jax.random.normal(keys[0], (n_batch, c_in, l_seq), jnp.float32)  # NCL input

    params = (
        init(keys[1], (3, c_in, c0), 3 * c_in), bias(keys[8], c0),        # stem
        init(keys[2], (c0, c_mid), c0),         bias(keys[9], c_mid),     # expand
        init(keys[3], (3, c_mid), 3),           bias(keys[10], c_mid),    # depthwise
        init(keys[4], (c_mid, c_se), c_mid),    bias(keys[11], c_se),     # SE reduce
        init(keys[5], (c_se, c_mid), c_se),     bias(keys[12], c_mid),    # SE expand
        init(keys[6], (c_mid, c0), c_mid),      bias(keys[13], c0),       # project
        init(keys[7], (c0, c_head), c0),        bias(keys[14], c_head),   # head
    )

    fwd = jax.jit(efficientnet_forward)        # auto tile pick (2 tiles for L=64)
    out = jax.block_until_ready(fwd(x, params))
    assert out.shape == (n_batch, c_head) and out.dtype == jnp.float32
    assert bool(jnp.all(jnp.isfinite(out)))

    # pure-JAX f32 reference; loose tolerance since kernels use bf16 matmuls
    ref = _reference_forward(x, params)
    max_err = float(jnp.max(jnp.abs(out - ref)))
    assert max_err < 5e-2, f"mismatch vs reference: max|diff|={max_err}"

    print("KERNEL_OK")
</pallas_src>

<mosaic_0001>
module attributes {stable_mosaic.version = 11 : i64} {
  func.func @_se_sum_kernel(%arg0: i32, %arg1: i32, %arg2: memref<1x1x34x12xf32, #tpu.memory_space<vmem>>, %arg3: memref<12x128xf32, #tpu.memory_space<vmem>>, %arg4: memref<1x128xf32, #tpu.memory_space<vmem>>, %arg5: memref<128x128xbf16, #tpu.memory_space<vmem>>, %arg6: memref<1x128xf32, #tpu.memory_space<vmem>>, %arg7: memref<3x128xf32, #tpu.memory_space<vmem>>, %arg8: memref<1x128xf32, #tpu.memory_space<vmem>>, %arg9: memref<1x1x1x128xf32, #tpu.memory_space<vmem>>) attributes {dimension_semantics = [#tpu.dimension_semantics<parallel>, #tpu.dimension_semantics<parallel>], iteration_bounds = array<i64: 2, 2>, scalar_prefetch = 0 : i64, scratch_operands = 0 : i64, tpu.core_type = #tpu.core_type<tc>, window_params = [{transform_indices = @transform_0, window_bounds = array<i64: 1, 1, 34, 12>}, {pipeline_mode = #tpu.pipeline_mode<synchronous>, transform_indices = @transform_1, window_bounds = array<i64: 12, 128>}, {pipeline_mode = #tpu.pipeline_mode<synchronous>, transform_indices = @transform_2, window_bounds = array<i64: 1, 128>}, {pipeline_mode = #tpu.pipeline_mode<synchronous>, transform_indices = @transform_3, window_bounds = array<i64: 128, 128>}, {pipeline_mode = #tpu.pipeline_mode<synchronous>, transform_indices = @transform_4, window_bounds = array<i64: 1, 128>}, {pipeline_mode = #tpu.pipeline_mode<synchronous>, transform_indices = @transform_5, window_bounds = array<i64: 3, 128>}, {pipeline_mode = #tpu.pipeline_mode<synchronous>, transform_indices = @transform_6, window_bounds = array<i64: 1, 128>}, {transform_indices = @transform_7, window_bounds = array<i64: 1, 1, 1, 128>}]} {
    %c0 = arith.constant 0 : index
    %c0_0 = arith.constant 0 : index
    %c0_1 = arith.constant 0 : index
    %c0_2 = arith.constant 0 : index
    %0 = vector.load %arg2[%c0, %c0_0, %c0_1, %c0_2] : memref<1x1x34x12xf32, #tpu.memory_space<vmem>>, vector<1x1x34x12xf32>
    %1 = vector.shape_cast %0 : vector<1x1x34x12xf32> to vector<34x12xf32>
    %c0_3 = arith.constant 0 : index
    %c0_4 = arith.constant 0 : index
    %2 = vector.load %arg3[%c0_3, %c0_4] : memref<12x128xf32, #tpu.memory_space<vmem>>, vector<12x128xf32>
    %cst = arith.constant dense<0.000000e+00> : vector<34x128xf32>
    %3 = tpu.matmul %1, %2, %cst {dimension_numbers = #tpu.dot_dimension_numbers<[1], [0], [0], [1], [0, 0, 1, 1], [], []>} : vector<34x12xf32>, vector<12x128xf32>, vector<34x128xf32> -> vector<34x128xf32>
    %c0_5 = arith.constant 0 : index
    %c0_6 = arith.constant 0 : index
    %4 = vector.load %arg4[%c0_5, %c0_6] : memref<1x128xf32, #tpu.memory_space<vmem>>, vector<1x128xf32>
    %5 = vector.broadcast %4 : vector<1x128xf32> to vector<34x128xf32>
    %6 = arith.addf %3, %5 : vector<34x128xf32>
    %7 = arith.negf %6 : vector<34x128xf32>
    %8 = math.exp %7 : vector<34x128xf32>
    %cst_7 = arith.constant 1.000000e+00 : f32
    %9 = vector.broadcast %cst_7 : f32 to vector<34x128xf32>
    %10 = arith.addf %9, %8 : vector<34x128xf32>
    %11 = arith.divf %9, %10 : vector<34x128xf32>
    %12 = arith.mulf %6, %11 : vector<34x128xf32>
    %13 = arith.truncf %12 : vector<34x128xf32> to vector<34x128xbf16>
    %c0_8 = arith.constant 0 : index
    %c0_9 = arith.constant 0 : index
    %14 = vector.load %arg5[%c0_8, %c0_9] : memref<128x128xbf16, #tpu.memory_space<vmem>>, vector<128x128xbf16>
    %cst_10 = arith.constant dense<0.000000e+00> : vector<34x128xf32>
    %15 = tpu.matmul %13, %14, %cst_10 {dimension_numbers = #tpu.dot_dimension_numbers<[1], [0], [0], [1], [0, 0, 1, 1], [], []>} : vector<34x128xbf16>, vector<128x128xbf16>, vector<34x128xf32> -> vector<34x128xf32>
    %c0_11 = arith.constant 0 : index
    %c0_12 = arith.constant 0 : index
    %16 = vector.load %arg6[%c0_11, %c0_12] : memref<1x128xf32, #tpu.memory_space<vmem>>, vector<1x128xf32>
    %17 = vector.broadcast %16 : vector<1x128xf32> to vector<34x128xf32>
    %18 = arith.addf %15, %17 : vector<34x128xf32>
    %19 = arith.negf %18 : vector<34x128xf32>
    %20 = math.exp %19 : vector<34x128xf32>
    %cst_13 = arith.constant 1.000000e+00 : f32
    %21 = vector.broadcast %cst_13 : f32 to vector<34x128xf32>
    %22 = arith.addf %21, %20 : vector<34x128xf32>
    %23 = arith.divf %21, %22 : vector<34x128xf32>
    %24 = arith.mulf %18, %23 : vector<34x128xf32>
    %c32_i32 = arith.constant 32 : i32
    %25 = arith.muli %arg1, %c32_i32 : i32
    %c1_i32 = arith.constant 1 : i32
    %26 = arith.subi %25, %c1_i32 : i32
    %27 = tpu.iota {dimensions = array<i32: 0>} : vector<34x1xi32>
    %28 = vector.broadcast %26 : i32 to vector<34x1xi32>
    %29 = arith.addi %28, %27 : vector<34x1xi32>
    %c0_i32 = arith.constant 0 : i32
    %30 = vector.broadcast %c0_i32 : i32 to vector<34x1xi32>
    %31 = arith.cmpi sge, %29, %30 : vector<34x1xi32>
    %c64_i32 = arith.constant 64 : i32
    %32 = vector.broadcast %c64_i32 : i32 to vector<34x1xi32>
    %33 = arith.cmpi slt, %29, %32 : vector<34x1xi32>
    %34 = arith.andi %31, %33 : vector<34x1xi1>
    %cst_14 = arith.constant 0.000000e+00 : f32
    %35 = vector.shape_cast %34 : vector<34x1xi1> to vector<34x1xi1>
    %36 = vector.broadcast %35 : vector<34x1xi1> to vector<34x128xi1>
    %37 = vector.broadcast %cst_14 : f32 to vector<34x128xf32>
    %38 = arith.select %36, %24, %37 : vector<34x128xi1>, vector<34x128xf32>
    %39 = vector.extract_strided_slice %38 {offsets = [0, 0], sizes = [32, 128], strides = [1, 1]} : vector<34x128xf32> to vector<32x128xf32>
    %c0_15 = arith.constant 0 : index
    %c0_16 = arith.constant 0 : index
    %40 = vector.load %arg7[%c0_15, %c0_16] : memref<3x128xf32, #tpu.memory_space<vmem>>, vector<1x128xf32>
    %41 = vector.broadcast %40 : vector<1x128xf32> to vector<32x128xf32>
    %42 = arith.mulf %39, %41 : vector<32x128xf32>
    %43 = vector.extract_strided_slice %38 {offsets = [1, 0], sizes = [32, 128], strides = [1, 1]} : vector<34x128xf32> to vector<32x128xf32>
    %c1 = arith.constant 1 : index
    %c0_17 = arith.constant 0 : index
    %44 = vector.load %arg7[%c1, %c0_17] : memref<3x128xf32, #tpu.memory_space<vmem>>, vector<1x128xf32>
    %45 = vector.broadcast %44 : vector<1x128xf32> to vector<32x128xf32>
    %46 = arith.mulf %43, %45 : vector<32x128xf32>
    %47 = arith.addf %42, %46 : vector<32x128xf32>
    %48 = vector.extract_strided_slice %38 {offsets = [2, 0], sizes = [32, 128], strides = [1, 1]} : vector<34x128xf32> to vector<32x128xf32>
    %c2 = arith.constant 2 : index
    %c0_18 = arith.constant 0 : index
    %49 = vector.load %arg7[%c2, %c0_18] : memref<3x128xf32, #tpu.memory_space<vmem>>, vector<1x128xf32>
    %50 = vector.broadcast %49 : vector<1x128xf32> to vector<32x128xf32>
    %51 = arith.mulf %48, %50 : vector<32x128xf32>
    %52 = arith.addf %47, %51 : vector<32x128xf32>
    %c0_19 = arith.constant 0 : index
    %c0_20 = arith.constant 0 : index
    %53 = vector.load %arg8[%c0_19, %c0_20] : memref<1x128xf32, #tpu.memory_space<vmem>>, vector<1x128xf32>
    %54 = vector.broadcast %53 : vector<1x128xf32> to vector<32x128xf32>
    %55 = arith.addf %52, %54 : vector<32x128xf32>
    %56 = arith.negf %55 : vector<32x128xf32>
    %57 = math.exp %56 : vector<32x128xf32>
    %cst_21 = arith.constant 1.000000e+00 : f32
    %58 = vector.broadcast %cst_21 : f32 to vector<32x128xf32>
    %59 = arith.addf %58, %57 : vector<32x128xf32>
    %60 = arith.divf %58, %59 : vector<32x128xf32>
    %61 = arith.mulf %55, %60 : vector<32x128xf32>
    %cst_22 = arith.constant dense<0.000000e+00> : vector<128xf32>
    %62 = vector.multi_reduction <add>, %61, %cst_22 [0] : vector<32x128xf32> to vector<128xf32>
    %63 = vector.shape_cast %62 : vector<128xf32> to vector<1x128xf32>
    %c0_23 = arith.constant 0 : index
    %c0_24 = arith.constant 0 : index
    %c0_25 = arith.constant 0 : index
    %c0_26 = arith.constant 0 : index
    %64 = vector.load %arg9[%c0_23, %c0_24, %c0_25, %c0_26] : memref<1x1x1x128xf32, #tpu.memory_space<vmem>>, vector<1x1x1x128xf32>
    %65 = vector.shape_cast %64 : vector<1x1x1x128xf32> to vector<1x128xf32>
    %66 = vector.shape_cast %63 : vector<1x128xf32> to vector<1x1x1x128xf32>
    tpu.vector_store %arg9[%c0_23, %c0_24, %c0_25, %c0_26], %66 {strides = array<i32>} : memref<1x1x1x128xf32, #tpu.memory_space<vmem>>, vector<1x1x1x128xf32>,
    return
  }
  func.func @transform_0(%arg0: i32, %arg1: i32) -> (i32, i32, i32, i32) {
    %c0_i32 = arith.constant 0 : i32
    %c0_i32_0 = arith.constant 0 : i32
    %c0_i32_1 = arith.constant 0 : i32
    return %arg1, %arg0, %c0_i32, %c0_i32_0 : i32, i32, i32, i32
  }
  func.func @transform_1(%arg0: i32, %arg1: i32) -> (i32, i32) {
    %c0_i32 = arith.constant 0 : i32
    %c0_i32_0 = arith.constant 0 : i32
    %c0_i32_1 = arith.constant 0 : i32
    return %c0_i32, %c0_i32_0 : i32, i32
  }
  func.func @transform_2(%arg0: i32, %arg1: i32) -> (i32, i32) {
    %c0_i32 = arith.constant 0 : i32
    %c0_i32_0 = arith.constant 0 : i32
    %c0_i32_1 = arith.constant 0 : i32
    return %c0_i32, %c0_i32_0 : i32, i32
  }
  func.func @transform_3(%arg0: i32, %arg1: i32) -> (i32, i32) {
    %c0_i32 = arith.constant 0 : i32
    %c0_i32_0 = arith.constant 0 : i32
    %c0_i32_1 = arith.constant 0 : i32
    return %c0_i32, %c0_i32_0 : i32, i32
  }
  func.func @transform_4(%arg0: i32, %arg1: i32) -> (i32, i32) {
    %c0_i32 = arith.constant 0 : i32
    %c0_i32_0 = arith.constant 0 : i32
    %c0_i32_1 = arith.constant 0 : i32
    return %c0_i32, %c0_i32_0 : i32, i32
  }
  func.func @transform_5(%arg0: i32, %arg1: i32) -> (i32, i32) {
    %c0_i32 = arith.constant 0 : i32
    %c0_i32_0 = arith.constant 0 : i32
    %c0_i32_1 = arith.constant 0 : i32
    return %c0_i32, %c0_i32_0 : i32, i32
  }
  func.func @transform_6(%arg0: i32, %arg1: i32) -> (i32, i32) {
    %c0_i32 = arith.constant 0 : i32
    %c0_i32_0 = arith.constant 0 : i32
    %c0_i32_1 = arith.constant 0 : i32
    return %c0_i32, %c0_i32_0 : i32, i32
  }
  func.func @transform_7(%arg0: i32, %arg1: i32) -> (i32, i32, i32, i32) {
    %c0_i32 = arith.constant 0 : i32
    %c0_i32_0 = arith.constant 0 : i32
    %c0_i32_1 = arith.constant 0 : i32
    return %arg1, %arg0, %c0_i32, %c0_i32_0 : i32, i32, i32, i32
  }
}

module attributes {stable_mosaic.version = 11 : i64} {
  func.func @_finish_kernel(%arg0: i32, %arg1: i32, %arg2: memref<1x1x34x12xf32, #tpu.memory_space<vmem>>, %arg3: memref<12x128xf32, #tpu.memory_space<vmem>>, %arg4: memref<1x128xf32, #tpu.memory_space<vmem>>, %arg5: memref<128x128xbf16, #tpu.memory_space<vmem>>, %arg6: memref<1x128xf32, #tpu.memory_space<vmem>>, %arg7: memref<3x128xf32, #tpu.memory_space<vmem>>, %arg8: memref<1x128xf32, #tpu.memory_space<vmem>>, %arg9: memref<1x1x128xf32, #tpu.memory_space<vmem>>, %arg10: memref<128x128xbf16, #tpu.memory_space<vmem>>, %arg11: memref<1x128xf32, #tpu.memory_space<vmem>>, %arg12: memref<128x128xbf16, #tpu.memory_space<vmem>>, %arg13: memref<1x128xf32, #tpu.memory_space<vmem>>, %arg14: memref<1x1x1x128xf32, #tpu.memory_space<vmem>>) attributes {dimension_semantics = [#tpu.dimension_semantics<parallel>, #tpu.dimension_semantics<parallel>], iteration_bounds = array<i64: 2, 2>, scalar_prefetch = 0 : i64, scratch_operands = 0 : i64, tpu.core_type = #tpu.core_type<tc>, window_params = [{transform_indices = @transform_0, window_bounds = array<i64: 1, 1, 34, 12>}, {pipeline_mode = #tpu.pipeline_mode<synchronous>, transform_indices = @transform_1, window_bounds = array<i64: 12, 128>}, {pipeline_mode = #tpu.pipeline_mode<synchronous>, transform_indices = @transform_2, window_bounds = array<i64: 1, 128>}, {pipeline_mode = #tpu.pipeline_mode<synchronous>, transform_indices = @transform_3, window_bounds = array<i64: 128, 128>}, {pipeline_mode = #tpu.pipeline_mode<synchronous>, transform_indices = @transform_4, window_bounds = array<i64: 1, 128>}, {pipeline_mode = #tpu.pipeline_mode<synchronous>, transform_indices = @transform_5, window_bounds = array<i64: 3, 128>}, {pipeline_mode = #tpu.pipeline_mode<synchronous>, transform_indices = @transform_6, window_bounds = array<i64: 1, 128>}, {transform_indices = @transform_7, window_bounds = array<i64: 1, 1, 128>}, {pipeline_mode = #tpu.pipeline_mode<synchronous>, transform_indices = @transform_8, window_bounds = array<i64: 128, 128>}, {pipeline_mode = #tpu.pipeline_mode<synchronous>, transform_indices = @transform_9, window_bounds = array<i64: 1, 128>}, {pipeline_mode = #tpu.pipeline_mode<synchronous>, transform_indices = @transform_10, window_bounds = array<i64: 128, 128>}, {pipeline_mode = #tpu.pipeline_mode<synchronous>, transform_indices = @transform_11, window_bounds = array<i64: 1, 128>}, {transform_indices = @transform_12, window_bounds = array<i64: 1, 1, 1, 128>}]} {
    %c0 = arith.constant 0 : index
    %c0_0 = arith.constant 0 : index
    %c0_1 = arith.constant 0 : index
    %c0_2 = arith.constant 0 : index
    %0 = vector.load %arg2[%c0, %c0_0, %c0_1, %c0_2] : memref<1x1x34x12xf32, #tpu.memory_space<vmem>>, vector<1x1x34x12xf32>
    %1 = vector.shape_cast %0 : vector<1x1x34x12xf32> to vector<34x12xf32>
    %c0_3 = arith.constant 0 : index
    %c0_4 = arith.constant 0 : index
    %2 = vector.load %arg3[%c0_3, %c0_4] : memref<12x128xf32, #tpu.memory_space<vmem>>, vector<12x128xf32>
    %cst = arith.constant dense<0.000000e+00> : vector<34x128xf32>
    %3 = tpu.matmul %1, %2, %cst {dimension_numbers = #tpu.dot_dimension_numbers<[1], [0], [0], [1], [0, 0, 1, 1], [], []>} : vector<34x12xf32>, vector<12x128xf32>, vector<34x128xf32> -> vector<34x128xf32>
    %c0_5 = arith.constant 0 : index
    %c0_6 = arith.constant 0 : index
    %4 = vector.load %arg4[%c0_5, %c0_6] : memref<1x128xf32, #tpu.memory_space<vmem>>, vector<1x128xf32>
    %5 = vector.broadcast %4 : vector<1x128xf32> to vector<34x128xf32>
    %6 = arith.addf %3, %5 : vector<34x128xf32>
    %7 = arith.negf %6 : vector<34x128xf32>
    %8 = math.exp %7 : vector<34x128xf32>
    %cst_7 = arith.constant 1.000000e+00 : f32
    %9 = vector.broadcast %cst_7 : f32 to vector<34x128xf32>
    %10 = arith.addf %9, %8 : vector<34x128xf32>
    %11 = arith.divf %9, %10 : vector<34x128xf32>
    %12 = arith.mulf %6, %11 : vector<34x128xf32>
    %13 = arith.truncf %12 : vector<34x128xf32> to vector<34x128xbf16>
    %c0_8 = arith.constant 0 : index
    %c0_9 = arith.constant 0 : index
    %14 = vector.load %arg5[%c0_8, %c0_9] : memref<128x128xbf16, #tpu.memory_space<vmem>>, vector<128x128xbf16>
    %cst_10 = arith.constant dense<0.000000e+00> : vector<34x128xf32>
    %15 = tpu.matmul %13, %14, %cst_10 {dimension_numbers = #tpu.dot_dimension_numbers<[1], [0], [0], [1], [0, 0, 1, 1], [], []>} : vector<34x128xbf16>, vector<128x128xbf16>, vector<34x128xf32> -> vector<34x128xf32>
    %c0_11 = arith.constant 0 : index
    %c0_12 = arith.constant 0 : index
    %16 = vector.load %arg6[%c0_11, %c0_12] : memref<1x128xf32, #tpu.memory_space<vmem>>, vector<1x128xf32>
    %17 = vector.broadcast %16 : vector<1x128xf32> to vector<34x128xf32>
    %18 = arith.addf %15, %17 : vector<34x128xf32>
    %19 = arith.negf %18 : vector<34x128xf32>
    %20 = math.exp %19 : vector<34x128xf32>
    %cst_13 = arith.constant 1.000000e+00 : f32
    %21 = vector.broadcast %cst_13 : f32 to vector<34x128xf32>
    %22 = arith.addf %21, %20 : vector<34x128xf32>
    %23 = arith.divf %21, %22 : vector<34x128xf32>
    %24 = arith.mulf %18, %23 : vector<34x128xf32>
    %c32_i32 = arith.constant 32 : i32
    %25 = arith.muli %arg1, %c32_i32 : i32
    %c1_i32 = arith.constant 1 : i32
    %26 = arith.subi %25, %c1_i32 : i32
    %27 = tpu.iota {dimensions = array<i32: 0>} : vector<34x1xi32>
    %28 = vector.broadcast %26 : i32 to vector<34x1xi32>
    %29 = arith.addi %28, %27 : vector<34x1xi32>
    %c0_i32 = arith.constant 0 : i32
    %30 = vector.broadcast %c0_i32 : i32 to vector<34x1xi32>
    %31 = arith.cmpi sge, %29, %30 : vector<34x1xi32>
    %c64_i32 = arith.constant 64 : i32
    %32 = vector.broadcast %c64_i32 : i32 to vector<34x1xi32>
    %33 = arith.cmpi slt, %29, %32 : vector<34x1xi32>
    %34 = arith.andi %31, %33 : vector<34x1xi1>
    %cst_14 = arith.constant 0.000000e+00 : f32
    %35 = vector.shape_cast %34 : vector<34x1xi1> to vector<34x1xi1>
    %36 = vector.broadcast %35 : vector<34x1xi1> to vector<34x128xi1>
    %37 = vector.broadcast %cst_14 : f32 to vector<34x128xf32>
    %38 = arith.select %36, %24, %37 : vector<34x128xi1>, vector<34x128xf32>
    %39 = vector.extract_strided_slice %38 {offsets = [0, 0], sizes = [32, 128], strides = [1, 1]} : vector<34x128xf32> to vector<32x128xf32>
    %c0_15 = arith.constant 0 : index
    %c0_16 = arith.constant 0 : index
    %40 = vector.load %arg7[%c0_15, %c0_16] : memref<3x128xf32, #tpu.memory_space<vmem>>, vector<1x128xf32>
    %41 = vector.broadcast %40 : vector<1x128xf32> to vector<32x128xf32>
    %42 = arith.mulf %39, %41 : vector<32x128xf32>
    %43 = vector.extract_strided_slice %38 {offsets = [1, 0], sizes = [32, 128], strides = [1, 1]} : vector<34x128xf32> to vector<32x128xf32>
    %c1 = arith.constant 1 : index
    %c0_17 = arith.constant 0 : index
    %44 = vector.load %arg7[%c1, %c0_17] : memref<3x128xf32, #tpu.memory_space<vmem>>, vector<1x128xf32>
    %45 = vector.broadcast %44 : vector<1x128xf32> to vector<32x128xf32>
    %46 = arith.mulf %43, %45 : vector<32x128xf32>
    %47 = arith.addf %42, %46 : vector<32x128xf32>
    %48 = vector.extract_strided_slice %38 {offsets = [2, 0], sizes = [32, 128], strides = [1, 1]} : vector<34x128xf32> to vector<32x128xf32>
    %c2 = arith.constant 2 : index
    %c0_18 = arith.constant 0 : index
    %49 = vector.load %arg7[%c2, %c0_18] : memref<3x128xf32, #tpu.memory_space<vmem>>, vector<1x128xf32>
    %50 = vector.broadcast %49 : vector<1x128xf32> to vector<32x128xf32>
    %51 = arith.mulf %48, %50 : vector<32x128xf32>
    %52 = arith.addf %47, %51 : vector<32x128xf32>
    %c0_19 = arith.constant 0 : index
    %c0_20 = arith.constant 0 : index
    %53 = vector.load %arg8[%c0_19, %c0_20] : memref<1x128xf32, #tpu.memory_space<vmem>>, vector<1x128xf32>
    %54 = vector.broadcast %53 : vector<1x128xf32> to vector<32x128xf32>
    %55 = arith.addf %52, %54 : vector<32x128xf32>
    %56 = arith.negf %55 : vector<32x128xf32>
    %57 = math.exp %56 : vector<32x128xf32>
    %cst_21 = arith.constant 1.000000e+00 : f32
    %58 = vector.broadcast %cst_21 : f32 to vector<32x128xf32>
    %59 = arith.addf %58, %57 : vector<32x128xf32>
    %60 = arith.divf %58, %59 : vector<32x128xf32>
    %61 = arith.mulf %55, %60 : vector<32x128xf32>
    %62 = vector.extract_strided_slice %12 {offsets = [1, 0], sizes = [32, 128], strides = [1, 1]} : vector<34x128xf32> to vector<32x128xf32>
    %c0_22 = arith.constant 0 : index
    %c0_23 = arith.constant 0 : index
    %c0_24 = arith.constant 0 : index
    %63 = vector.load %arg9[%c0_22, %c0_23, %c0_24] : memref<1x1x128xf32, #tpu.memory_space<vmem>>, vector<1x1x128xf32>
    %64 = vector.shape_cast %63 : vector<1x1x128xf32> to vector<1x128xf32>
    %65 = vector.broadcast %64 : vector<1x128xf32> to vector<32x128xf32>
    %66 = arith.mulf %61, %65 : vector<32x128xf32>
    %67 = arith.truncf %66 : vector<32x128xf32> to vector<32x128xbf16>
    %c0_25 = arith.constant 0 : index
    %c0_26 = arith.constant 0 : index
    %68 = vector.load %arg10[%c0_25, %c0_26] : memref<128x128xbf16, #tpu.memory_space<vmem>>, vector<128x128xbf16>
    %cst_27 = arith.constant dense<0.000000e+00> : vector<32x128xf32>
    %69 = tpu.matmul %67, %68, %cst_27 {dimension_numbers = #tpu.dot_dimension_numbers<[1], [0], [0], [1], [0, 0, 1, 1], [], []>} : vector<32x128xbf16>, vector<128x128xbf16>, vector<32x128xf32> -> vector<32x128xf32>
    %c0_28 = arith.constant 0 : index
    %c0_29 = arith.constant 0 : index
    %70 = vector.load %arg11[%c0_28, %c0_29] : memref<1x128xf32, #tpu.memory_space<vmem>>, vector<1x128xf32>
    %71 = vector.broadcast %70 : vector<1x128xf32> to vector<32x128xf32>
    %72 = arith.addf %69, %71 : vector<32x128xf32>
    %73 = arith.addf %72, %62 : vector<32x128xf32>
    %74 = arith.truncf %73 : vector<32x128xf32> to vector<32x128xbf16>
    %c0_30 = arith.constant 0 : index
    %c0_31 = arith.constant 0 : index
    %75 = vector.load %arg12[%c0_30, %c0_31] : memref<128x128xbf16, #tpu.memory_space<vmem>>, vector<128x128xbf16>
    %cst_32 = arith.constant dense<0.000000e+00> : vector<32x128xf32>
    %76 = tpu.matmul %74, %75, %cst_32 {dimension_numbers = #tpu.dot_dimension_numbers<[1], [0], [0], [1], [0, 0, 1, 1], [], []>} : vector<32x128xbf16>, vector<128x128xbf16>, vector<32x128xf32> -> vector<32x128xf32>
    %c0_33 = arith.constant 0 : index
    %c0_34 = arith.constant 0 : index
    %77 = vector.load %arg13[%c0_33, %c0_34] : memref<1x128xf32, #tpu.memory_space<vmem>>, vector<1x128xf32>
    %78 = vector.broadcast %77 : vector<1x128xf32> to vector<32x128xf32>
    %79 = arith.addf %76, %78 : vector<32x128xf32>
    %80 = arith.negf %79 : vector<32x128xf32>
    %81 = math.exp %80 : vector<32x128xf32>
    %cst_35 = arith.constant 1.000000e+00 : f32
    %82 = vector.broadcast %cst_35 : f32 to vector<32x128xf32>
    %83 = arith.addf %82, %81 : vector<32x128xf32>
    %84 = arith.divf %82, %83 : vector<32x128xf32>
    %85 = arith.mulf %79, %84 : vector<32x128xf32>
    %cst_36 = arith.constant dense<0.000000e+00> : vector<128xf32>
    %86 = vector.multi_reduction <add>, %85, %cst_36 [0] : vector<32x128xf32> to vector<128xf32>
    %87 = vector.shape_cast %86 : vector<128xf32> to vector<1x128xf32>
    %c0_37 = arith.constant 0 : index
    %c0_38 = arith.constant 0 : index
    %c0_39 = arith.constant 0 : index
    %c0_40 = arith.constant 0 : index
    %88 = vector.load %arg14[%c0_37, %c0_38, %c0_39, %c0_40] : memref<1x1x1x128xf32, #tpu.memory_space<vmem>>, vector<1x1x1x128xf32>
    %89 = vector.shape_cast %88 : vector<1x1x1x128xf32> to vector<1x128xf32>
    %90 = vector.shape_cast %87 : vector<1x128xf32> to vector<1x1x1x128xf32>
    tpu.vector_store %arg14[%c0_37, %c0_38, %c0_39, %c0_40], %90 {strides = array<i32>} : memref<1x1x1x128xf32, #tpu.memory_space<vmem>>, vector<1x1x1x128xf32>,
    return
  }
  func.func @transform_0(%arg0: i32, %arg1: i32) -> (i32, i32, i32, i32) {
    %c0_i32 = arith.constant 0 : i32
    %c0_i32_0 = arith.constant 0 : i32
    %c0_i32_1 = arith.constant 0 : i32
    return %arg1, %arg0, %c0_i32, %c0_i32_0 : i32, i32, i32, i32
  }
  func.func @transform_1(%arg0: i32, %arg1: i32) -> (i32, i32) {
    %c0_i32 = arith.constant 0 : i32
    %c0_i32_0 = arith.constant 0 : i32
    %c0_i32_1 = arith.constant 0 : i32
    return %c0_i32, %c0_i32_0 : i32, i32
  }
  func.func @transform_2(%arg0: i32, %arg1: i32) -> (i32, i32) {
    %c0_i32 = arith.constant 0 : i32
    %c0_i32_0 = arith.constant 0 : i32
    %c0_i32_1 = arith.constant 0 : i32
    return %c0_i32, %c0_i32_0 : i32, i32
  }
  func.func @transform_3(%arg0: i32, %arg1: i32) -> (i32, i32) {
    %c0_i32 = arith.constant 0 : i32
    %c0_i32_0 = arith.constant 0 : i32
    %c0_i32_1 = arith.constant 0 : i32
    return %c0_i32, %c0_i32_0 : i32, i32
  }
  func.func @transform_4(%arg0: i32, %arg1: i32) -> (i32, i32) {
    %c0_i32 = arith.constant 0 : i32
    %c0_i32_0 = arith.constant 0 : i32
    %c0_i32_1 = arith.constant 0 : i32
    return %c0_i32, %c0_i32_0 : i32, i32
  }
  func.func @transform_5(%arg0: i32, %arg1: i32) -> (i32, i32) {
    %c0_i32 = arith.constant 0 : i32
    %c0_i32_0 = arith.constant 0 : i32
    %c0_i32_1 = arith.constant 0 : i32
    return %c0_i32, %c0_i32_0 : i32, i32
  }
  func.func @transform_6(%arg0: i32, %arg1: i32) -> (i32, i32) {
    %c0_i32 = arith.constant 0 : i32
    %c0_i32_0 = arith.constant 0 : i32
    %c0_i32_1 = arith.constant 0 : i32
    return %c0_i32, %c0_i32_0 : i32, i32
  }
  func.func @transform_7(%arg0: i32, %arg1: i32) -> (i32, i32, i32) {
    %c0_i32 = arith.constant 0 : i32
    %c0_i32_0 = arith.constant 0 : i32
    %c0_i32_1 = arith.constant 0 : i32
    return %arg0, %c0_i32, %c0_i32_0 : i32, i32, i32
  }
  func.func @transform_8(%arg0: i32, %arg1: i32) -> (i32, i32) {
    %c0_i32 = arith.constant 0 : i32
    %c0_i32_0 = arith.constant 0 : i32
    %c0_i32_1 = arith.constant 0 : i32
    return %c0_i32, %c0_i32_0 : i32, i32
  }
  func.func @transform_9(%arg0: i32, %arg1: i32) -> (i32, i32) {
    %c0_i32 = arith.constant 0 : i32
    %c0_i32_0 = arith.constant 0 : i32
    %c0_i32_1 = arith.constant 0 : i32
    return %c0_i32, %c0_i32_0 : i32, i32
  }
  func.func @transform_10(%arg0: i32, %arg1: i32) -> (i32, i32) {
    %c0_i32 = arith.constant 0 : i32
    %c0_i32_0 = arith.constant 0 : i32
    %c0_i32_1 = arith.constant 0 : i32
    return %c0_i32, %c0_i32_0 : i32, i32
  }
  func.func @transform_11(%arg0: i32, %arg1: i32) -> (i32, i32) {
    %c0_i32 = arith.constant 0 : i32
    %c0_i32_0 = arith.constant 0 : i32
    %c0_i32_1 = arith.constant 0 : i32
    return %c0_i32, %c0_i32_0 : i32, i32
  }
  func.func @transform_12(%arg0: i32, %arg1: i32) -> (i32, i32, i32, i32) {
    %c0_i32 = arith.constant 0 : i32
    %c0_i32_0 = arith.constant 0 : i32
    %c0_i32_1 = arith.constant 0 : i32
    return %arg1, %arg0, %c0_i32, %c0_i32_0 : i32, i32, i32, i32
  }
}

</mosaic_0001>

<llo_original>
// kernel: efficientnet_forward.2
$region0: #{efficientnet_forward.2}
  #allocation0 [shape = 'u32[]', space=smem, size = 0x4, offset = 0x4, fixed_abs, tag = 'smem constant byte address 0x4 - core index']
  #allocation1 [shape = 'u32[144,128]{1,0:T(1,128)}', space=vmem, size = 0x12000, scoped, tag = 'internal scratch']
  %s0 = inlined_call_operand.vmem [shape: f32[2,2,34,12], index: 0, kind: input, shape index: {}]
  %s1 = inlined_call_operand.vmem [shape: f32[12,128], index: 1, kind: input, shape index: {}]
  %s2 = inlined_call_operand.vmem [shape: f32[1,128], index: 2, kind: input, shape index: {}]
  %s3 = inlined_call_operand.vmem [shape: bf16[128,128], index: 3, kind: input, shape index: {}]
  %s4 = inlined_call_operand.vmem [shape: f32[1,128], index: 4, kind: input, shape index: {}]
  %s5 = inlined_call_operand.vmem [shape: f32[3,128], index: 5, kind: input, shape index: {}]
  %s6 = inlined_call_operand.vmem [shape: f32[1,128], index: 6, kind: input, shape index: {}]
  %s7 = inlined_call_operand.vmem [shape: f32[2,2,1,128], index: 7, kind: output, shape index: {}]
  %s8 = sld [smem:[#allocation0]]
  $region61: #{efficientnet_forward.2} parent=0
    _
  %s10 = ssub.s32 1, %s8
  %s11 = scalar_select 0, %s10, %s8
  loop: start=0, step=1, limit=6
  $region2: #{efficientnet_forward.2} parent=0 // loop_pre_header
    _
  $region3: #{efficientnet_forward.2} parent=0 // loop_header
    %s13 = sphi 0, %s17
    %p14 = scmp.ge.s32.totalorder %s13, 6
    %s20 = sphi 0, %s32
    %s21 = sphi 0, %s28
    %s22 = sphi 0, %s20
    %s23 = sphi 0, %s21
    %s24 = sphi 0, %s22
    %s25 = sphi 0, %s23
    %s37 = sphi 0, %s39
    %s40 = sphi 0, %s37
    %s41 = sphi 0, %s40
    %s57 = sphi 0, %s41
    %s61 = sphi 0, %s61
    %s63 = sphi 0, %s61
    %s64 = sphi 0, %s63
    %s78 = sphi 0, %s64
    %s82 = sphi 0, %s82
    %s84 = sphi 0, %s82
    %s85 = sphi 0, %s84
    %s99 = sphi 0, %s85
    %s103 = sphi 0, %s103
    %s105 = sphi 0, %s103
    %s106 = sphi 0, %s105
    %s120 = sphi 0, %s106
    %s124 = sphi 0, %s124
    %s126 = sphi 0, %s124
    %s127 = sphi 0, %s126
    %s141 = sphi 0, %s127
    %s145 = sphi 0, %s145
    %s147 = sphi 0, %s145
    %s148 = sphi 0, %s147
    %s162 = sphi 0, %s148
    %s166 = sphi 0, %s166
    %s168 = sphi 0, %s166
    %s169 = sphi 0, %s168
    %s183 = sphi 0, %s169
    %s191 = sphi 0, %s193
    %s194 = sphi 0, %s191
    %s195 = sphi 0, %s194
    %s211 = sphi 0, %s195
  $region4: #{efficientnet_forward.2} parent=0 // loop_header_branch
    %16 = sbr.rel (%p14) target = $region8
  $region5: #{efficientnet_forward.2} parent=0 // loop_body
    %s18 = ssub.s32 %s13, 1
    %s19 = ssub.s32 %s13, 2
    %s26 = sadd.s32 1, %s21
    %p27 = scmp.ge.s32.totalorder %s26, 2
    %s28 = scalar_select %p27, 0, %s26
    %s29 = sadd.s32 1, %s20
    %s30 = scalar_select %p27, %s29, %s20
    %p31 = scmp.ge.s32.totalorder %s30, 2
    %s32 = scalar_select %p31, 0, %s30
    %s33 = ssub.s32 %s21, %s28
    %s34 = ssub.s32 %s20, %s32
    %s35 = sor.u32 %s33, %s34
    %p36 = scmp.eq.s32.totalorder %s35, 0
    %s38 = sadd.s32 %s37, 1
    %s39 = scalar_select %p36, %s37, %s38
    %p42 = pneg %p36
    %p43 = scmp.eq.s32.totalorder %s13, 3
    %p44 = por %p42, %p43
    %p45 = scmp.ne.s32.totalorder %s37, %s40
    %p46 = scmp.eq.s32.totalorder %s13, 0
    %p47 = por %p45, %p46
    %p48 = scmp.ne.s32.totalorder %s37, %s40
    %p49 = scmp.eq.s32.totalorder %s18, 3
    %p50 = por %p48, %p49
    %p51 = scmp.ne.s32.totalorder %s40, %s41
    %p52 = scmp.eq.s32.totalorder %s18, 0
    %p53 = por %p51, %p52
    %p54 = scmp.ne.s32.totalorder %s40, %s41
    %p55 = scmp.eq.s32.totalorder %s19, 3
    %p56 = por %p54, %p55
    %p58 = scmp.ne.s32.totalorder %s41, %s57
    %p59 = scmp.eq.s32.totalorder %s19, 0
    %p60 = por %p58, %p59
    %s62 = sadd.s32 %s61, 1
    %p65 = scmp.eq.s32.totalorder %s13, 3
    %p66 = scmp.ne.s32.totalorder %s61, %s63
    %p67 = scmp.eq.s32.totalorder %s13, 0
    %p68 = por %p66, %p67
    %p69 = scmp.ne.s32.totalorder %s61, %s63
    %p70 = scmp.eq.s32.totalorder %s18, 3
    %p71 = por %p69, %p70
    %p72 = scmp.ne.s32.totalorder %s63, %s64
    %p73 = scmp.eq.s32.totalorder %s18, 0
    %p74 = por %p72, %p73
    %p75 = scmp.ne.s32.totalorder %s63, %s64
    %p76 = scmp.eq.s32.totalorder %s19, 3
    %p77 = por %p75, %p76
    %p79 = scmp.ne.s32.totalorder %s64, %s78
    %p80 = scmp.eq.s32.totalorder %s19, 0
    %p81 = por %p79, %p80
    %s83 = sadd.s32 %s82, 1
    %p86 = scmp.eq.s32.totalorder %s13, 3
    %p87 = scmp.ne.s32.totalorder %s82, %s84
    %p88 = scmp.eq.s32.totalorder %s13, 0
    %p89 = por %p87, %p88
    %p90 = scmp.ne.s32.totalorder %s82, %s84
    %p91 = scmp.eq.s32.totalorder %s18, 3
    %p92 = por %p90, %p91
    %p93 = scmp.ne.s32.totalorder %s84, %s85
    %p94 = scmp.eq.s32.totalorder %s18, 0
    %p95 = por %p93, %p94
    %p96 = scmp.ne.s32.totalorder %s84, %s85
    %p97 = scmp.eq.s32.totalorder %s19, 3
    %p98 = por %p96, %p97
    %p100 = scmp.ne.s32.totalorder %s85, %s99
    %p101 = scmp.eq.s32.totalorder %s19, 0
    %p102 = por %p100, %p101
    %s104 = sadd.s32 %s103, 1
    %p107 = scmp.eq.s32.totalorder %s13, 3
    %p108 = scmp.ne.s32.totalorder %s103, %s105
    %p109 = scmp.eq.s32.totalorder %s13, 0
    %p110 = por %p108, %p109
    %p111 = scmp.ne.s32.totalorder %s103, %s105
    %p112 = scmp.eq.s32.totalorder %s18, 3
    %p113 = por %p111, %p112
    %p114 = scmp.ne.s32.totalorder %s105, %s106
    %p115 = scmp.eq.s32.totalorder %s18, 0
    %p116 = por %p114, %p115
    %p117 = scmp.ne.s32.totalorder %s105, %s106
    %p118 = scmp.eq.s32.totalorder %s19, 3
    %p119 = por %p117, %p118
    %p121 = scmp.ne.s32.totalorder %s106, %s120
    %p122 = scmp.eq.s32.totalorder %s19, 0
    %p123 = por %p121, %p122
    %s125 = sadd.s32 %s124, 1
    %p128 = scmp.eq.s32.totalorder %s13, 3
    %p129 = scmp.ne.s32.totalorder %s124, %s126
    %p130 = scmp.eq.s32.totalorder %s13, 0
    %p131 = por %p129, %p130
    %p132 = scmp.ne.s32.totalorder %s124, %s126
    %p133 = scmp.eq.s32.totalorder %s18, 3
    %p134 = por %p132, %p133
    %p135 = scmp.ne.s32.totalorder %s126, %s127
    %p136 = scmp.eq.s32.totalorder %s18, 0
    %p137 = por %p135, %p136
    %p138 = scmp.ne.s32.totalorder %s126, %s127
    %p139 = scmp.eq.s32.totalorder %s19, 3
    %p140 = por %p138, %p139
    %p142 = scmp.ne.s32.totalorder %s127, %s141
    %p143 = scmp.eq.s32.totalorder %s19, 0
    %p144 = por %p142, %p143
    %s146 = sadd.s32 %s145, 1
    %p149 = scmp.eq.s32.totalorder %s13, 3
    %p150 = scmp.ne.s32.totalorder %s145, %s147
    %p151 = scmp.eq.s32.totalorder %s13, 0
    %p152 = por %p150, %p151
    %p153 = scmp.ne.s32.totalorder %s145, %s147
    %p154 = scmp.eq.s32.totalorder %s18, 3
    %p155 = por %p153, %p154
    %p156 = scmp.ne.s32.totalorder %s147, %s148
    %p157 = scmp.eq.s32.totalorder %s18, 0
    %p158 = por %p156, %p157
    %p159 = scmp.ne.s32.totalorder %s147, %s148
    %p160 = scmp.eq.s32.totalorder %s19, 3
    %p161 = por %p159, %p160
    %p163 = scmp.ne.s32.totalorder %s148, %s162
    %p164 = scmp.eq.s32.totalorder %s19, 0
    %p165 = por %p163, %p164
    %s167 = sadd.s32 %s166, 1
    %p170 = scmp.eq.s32.totalorder %s13, 3
    %p171 = scmp.ne.s32.totalorder %s166, %s168
    %p172 = scmp.eq.s32.totalorder %s13, 0
    %p173 = por %p171, %p172
    %p174 = scmp.ne.s32.totalorder %s166, %s168
    %p175 = scmp.eq.s32.totalorder %s18, 3
    %p176 = por %p174, %p175
    %p177 = scmp.ne.s32.totalorder %s168, %s169
    %p178 = scmp.eq.s32.totalorder %s18, 0
    %p179 = por %p177, %p178
    %p180 = scmp.ne.s32.totalorder %s168, %s169
    %p181 = scmp.eq.s32.totalorder %s19, 3
    %p182 = por %p180, %p181
    %p184 = scmp.ne.s32.totalorder %s169, %s183
    %p185 = scmp.eq.s32.totalorder %s19, 0
    %p186 = por %p184, %p185
    %s187 = ssub.s32 %s21, %s28
    %s188 = ssub.s32 %s20, %s32
    %s189 = sor.u32 %s187, %s188
    %p190 = scmp.eq.s32.totalorder %s189, 0
    %s192 = sadd.s32 %s191, 1
    %s193 = scalar_select %p190, %s191, %s192
    %p196 = pneg %p190
    %p197 = scmp.eq.s32.totalorder %s13, 3
    %p198 = por %p196, %p197
    %p199 = scmp.ne.s32.totalorder %s191, %s194
    %p200 = scmp.eq.s32.totalorder %s13, 0
    %p201 = por %p199, %p200
    %p202 = scmp.ne.s32.totalorder %s191, %s194
    %p203 = scmp.eq.s32.totalorder %s18, 3
    %p204 = por %p202, %p203
    %p205 = scmp.ne.s32.totalorder %s194, %s195
    %p206 = scmp.eq.s32.totalorder %s18, 0
    %p207 = por %p205, %p206
    %p208 = scmp.ne.s32.totalorder %s194, %s195
    %p209 = scmp.eq.s32.totalorder %s19, 3
    %p210 = por %p208, %p209
    %p212 = scmp.ne.s32.totalorder %s195, %s211
    %p213 = scmp.eq.s32.totalorder %s19, 0
    %p214 = por %p212, %p213
    %p215 = scmp.le.s32.totalorder 1, %s13
    %p216 = scmp.lt.s32.totalorder %s13, 5
    %p217 = pnand %p215, %p216
    %p218 = pneg %p217
    // Predicated region
    $region9: #{efficientnet_forward.2} parent=5 // pred_check
      _
    $region10: #{efficientnet_forward.2} parent=5 // pred_check_branch
      %220 = sbr.rel (%p217) target = $region12
    $region11: #{efficientnet_forward.2} parent=5 // pred_region
      %s221 = ssub.s32 %s13, 1
      // Predicated region
      $region13: #{efficientnet_forward.2} parent=11 // pred_check
        %p222 = pneg %p74
      $region14: #{efficientnet_forward.2} parent=11 // pred_check_branch
        %224 = sbr.rel (%p222) target = $region16
      $region15: #{efficientnet_forward.2} parent=11 // pred_region
        _
      $region16: #{efficientnet_forward.2} parent=11 // pred_fallthru
        _
      // Predicated region
      $region17: #{efficientnet_forward.2} parent=11 // pred_check
        %p225 = pneg %p95
      $region18: #{efficientnet_forward.2} parent=11 // pred_check_branch
        %227 = sbr.rel (%p225) target = $region20
      $region19: #{efficientnet_forward.2} parent=11 // pred_region
        _
      $region20: #{efficientnet_forward.2} parent=11 // pred_fallthru
        _
      // Predicated region
      $region21: #{efficientnet_forward.2} parent=11 // pred_check
        %p228 = pneg %p116
      $region22: #{efficientnet_forward.2} parent=11 // pred_check_branch
        %230 = sbr.rel (%p228) target = $region24
      $region23: #{efficientnet_forward.2} parent=11 // pred_region
        _
      $region24: #{efficientnet_forward.2} parent=11 // pred_fallthru
        _
      // Predicated region
      $region25: #{efficientnet_forward.2} parent=11 // pred_check
        %p231 = pneg %p137
      $region26: #{efficientnet_forward.2} parent=11 // pred_check_branch
        %233 = sbr.rel (%p231) target = $region28
      $region27: #{efficientnet_forward.2} parent=11 // pred_region
        _
      $region28: #{efficientnet_forward.2} parent=11 // pred_fallthru
        _
      // Predicated region
      $region29: #{efficientnet_forward.2} parent=11 // pred_check
        %p234 = pneg %p158
      $region30: #{efficientnet_forward.2} parent=11 // pred_check_branch
        %236 = sbr.rel (%p234) target = $region32
      $region31: #{efficientnet_forward.2} parent=11 // pred_region
        _
      $region32: #{efficientnet_forward.2} parent=11 // pred_fallthru
        _
      // Predicated region
      $region33: #{efficientnet_forward.2} parent=11 // pred_check
        %p237 = pneg %p179
      $region34: #{efficientnet_forward.2} parent=11 // pred_check_branch
        %239 = sbr.rel (%p237) target = $region36
      $region35: #{efficientnet_forward.2} parent=11 // pred_region
        _
      $region36: #{efficientnet_forward.2} parent=11 // pred_fallthru
        _
    $region12: #{efficientnet_forward.2} parent=5 // pred_fallthru
      _
    %p240 = scmp.lt.s32.totalorder %s13, 4
    // Predicated region
    $region37: #{efficientnet_forward.2} parent=5 // pred_check
      %p241 = pneg %p240
    $region38: #{efficientnet_forward.2} parent=5 // pred_check_branch
      %243 = sbr.rel (%p241) target = $region40
    $region39: #{efficientnet_forward.2} parent=5 // pred_region
      // Predicated region
      $region41: #{efficientnet_forward.2} parent=39 // pred_check
        %p244 = pneg %p47
      $region42: #{efficientnet_forward.2} parent=39 // pred_check_branch
        %246 = sbr.rel (%p244) target = $region44
      $region43: #{efficientnet_forward.2} parent=39 // pred_region
        %p247 = scmp.lt.s32.totalorder %s21, 1
        %s248 = scalar_select %p247, %s21, 1
        %p249 = scmp.lt.s32.totalorder %s20, 1
        %s250 = scalar_select %p249, %s20, 1
        %s251 = smul.addr %s250, 5
        %s252 = smul.addr %s248, 10
        %s253 = sadd.s32 %s251, %s252
        %s254 = smul.addr %s253, 8
        %s255 = scalar_lea.vmem %s0, %s254
      $region44: #{efficientnet_forward.2} parent=39 // pred_fallthru
        _
    $region40: #{efficientnet_forward.2} parent=5 // pred_fallthru
      _
    %p256 = scmp.le.s32.totalorder 1, %s13
    %p257 = scmp.lt.s32.totalorder %s13, 5
    %p258 = pnand %p256, %p257
    %p259 = pneg %p258
    // Predicated region
    $region45: #{efficientnet_forward.2} parent=5 // pred_check
      _
    $region46: #{efficientnet_forward.2} parent=5 // pred_check_branch
      %261 = sbr.rel (%p258) target = $region48
    $region47: #{efficientnet_forward.2} parent=5 // pred_region
      %s262 = ssub.s32 %s13, 1
      %p263 = scmp.lt.s32.totalorder %s23, 1
      %s264 = scalar_select %p263, %s23, 1
      %p265 = scmp.lt.s32.totalorder %s22, 1
      %s266 = scalar_select %p265, %s22, 1
      %s267 = smul.addr %s266, 5
      %s268 = smul.addr %s264, 10
      %s269 = sadd.s32 %s267, %s268
      %s270 = smul.addr %s269, 8
      %s271 = scalar_lea.vmem %s0, %s270
      %p272 = pneg %p53
      %p273 = pneg %p50
      %p274 = pneg %p74
      %p275 = pneg %p71
      %p276 = pneg %p95
      %p277 = pneg %p92
      %p278 = pneg %p116
      %p279 = pneg %p113
      %p280 = pneg %p137
      %p281 = pneg %p134
      %p282 = pneg %p158
      %p283 = pneg %p155
      %p284 = pneg %p179
      %p285 = pneg %p176
      %p286 = pneg %p207
      %p287 = pneg %p204
      %p288 = scmp.lt.s32.totalorder %s23, 1
      %s289 = scalar_select %p288, %s23, 1
      %p290 = scmp.lt.s32.totalorder %s22, 1
      %s291 = scalar_select %p290, %s22, 1
      %s292 = smul.addr %s289, 2
      %s293 = sadd.s32 %s291, %s292
      %s294 = scalar_lea.vmem %s7, %s293
      %p295 = scmp.lt.s32.totalorder %s23, 1
      %s296 = scalar_select %p295, %s23, 1
      %p297 = scmp.lt.s32.totalorder %s22, 1
      %s298 = scalar_select %p297, %s22, 1
      %s299 = smul.addr %s298, 5
      %s300 = smul.addr %s296, 10
      %s301 = sadd.s32 %s299, %s300
      %s302 = smul.addr %s301, 8
      %s303 = scalar_lea.vmem %s0, %s302
      %p304 = scmp.lt.s32.totalorder %s23, 1
      %s305 = scalar_select %p304, %s23, 1
      %p306 = scmp.lt.s32.totalorder %s22, 1
      %s307 = scalar_select %p306, %s22, 1
      %s308 = smul.addr %s305, 2
      %s309 = sadd.s32 %s307, %s308
      %s310 = scalar_lea.vmem %s7, %s309
      %v312 = vld [vmem:[%s303] sm:$0xff]
      %v313 = vld [vmem:[%s303 + $0x8] sm:$0xff]
      %v314 = vld [vmem:[%s303 + $0x10] sm:$0xff]
      %v315 = vld [vmem:[%s303 + $0x18] sm:$0xff]
      %v316 = vld [vmem:[%s303 + $0x20] sm:$0x3]
      %v317 = vld [vmem:[%s1] sm:$0xff]
      %v318 = vld [vmem:[%s1 + $0x8] sm:$0xf]
      %v319 = vld [vmem:[%s2] sm:$0x1]
      %v321 = vlaneseq
      %v322 = vshrl.u32 %v321, 7
      %v323 = vsub.s32 0, %v322
      %v324 = vrot.slane %v319, %v323
      %vm326 = vcmask 97280
      %v328 = vsel %vm326, %v312, 0
      %v331 = vsel %vm326, %v313, 0
      %v334 = vsel %vm326, %v314, 0
      %v337 = vsel %vm326, %v315, 0
      %v340 = vsel %vm326, %v316, 0
      %vm342 = vcmask 1043456
      %v344 = vsel %vm342, %v318, 0
      %346 = vmatprep.subr.mxu0 0.0
      %347 = vmatpush1.msra.mxu0 0.0
      %348 = vmatprep.subr.mxu0 0.0
      %349 = vmatpush1.msra.mxu0 0.0
      %350 = vmatprep.subr.mxu0 0.0
      %351 = vmatpush1.msra.mxu0 0.0
      %352 = vmatprep.subr.mxu0 0.0
      %353 = vmatpush1.msra.mxu0 0.0
      %354 = vmatprep.subr.mxu0 0.0
      %355 = vmatpush1.msra.mxu0 0.0
      %356 = vmatprep.subr.mxu0 0.0
      %357 = vmatpush1.msra.mxu0 0.0
      %358 = vmatprep.subr.mxu0 0.0
      %359 = vmatpush1.msra.mxu0 0.0
      %360 = vmatprep.subr.mxu0 0.0
      %361 = vmatpush1.msra.mxu0 0.0
      %362 = vmatprep.subr.mxu0 0.0
      %363 = vmatpush1.msra.mxu0 0.0
      %364 = vmatprep.subr.mxu0 0.0
      %365 = vmatpush1.msra.mxu0 0.0
      %366 = vmatprep.subr.mxu0 0.0
      %367 = vmatpush1.msra.mxu0 0.0
      %368 = vmatprep.subr.mxu0 0.0
      %369 = vmatpush1.msra.mxu0 0.0
      %370 = vmatprep.subr.mxu0 0.0
      %371 = vmatpush1.msra.mxu0 0.0
      %372 = vmatprep.subr.mxu0 0.0
      %373 = vmatpush1.msra.mxu0 0.0
      %374 = vmatprep.subr.mxu0 0.0
      %375 = vmatpush1.msra.mxu0 %v344
      %376 = vmatprep.subr.mxu0 0.0
      %377 = vmatpush1.msra.mxu0 %v317
      %378 = vmatprep.subr.mxu0 0.0
      %379 = vmatpush2.msra.mxu0 0.0
      %380 = vmatprep.subr.mxu0 0.0
      %381 = vmatpush2.msra.mxu0 0.0
      %382 = vmatprep.subr.mxu0 0.0
      %383 = vmatpush2.msra.mxu0 0.0
      %384 = vmatprep.subr.mxu0 0.0
      %385 = vmatpush2.msra.mxu0 0.0
      %386 = vmatprep.subr.mxu0 0.0
      %387 = vmatpush2.msra.mxu0 0.0
      %388 = vmatprep.subr.mxu0 0.0
      %389 = vmatpush2.msra.mxu0 0.0
      %390 = vmatprep.subr.mxu0 0.0
      %391 = vmatpush2.msra.mxu0 0.0
      %392 = vmatprep.subr.mxu0 0.0
      %393 = vmatpush2.msra.mxu0 0.0
      %394 = vmatprep.subr.mxu0 0.0
      %395 = vmatpush2.msra.mxu0 0.0
      %396 = vmatprep.subr.mxu0 0.0
      %397 = vmatpush2.msra.mxu0 0.0
      %398 = vmatprep.subr.mxu0 0.0
      %399 = vmatpush2.msra.mxu0 0.0
      %400 = vmatprep.subr.mxu0 0.0
      %401 = vmatpush2.msra.mxu0 0.0
      %402 = vmatprep.subr.mxu0 0.0
      %403 = vmatpush2.msra.mxu0 0.0
      %404 = vmatprep.subr.mxu0 0.0
      %405 = vmatpush2.msra.mxu0 0.0
      %406 = vmatprep.subr.mxu0 0.0
      %407 = vmatpush2.msra.mxu0 0.0
      %408 = vmatprep.subr.mxu0 0.0
      %409 = vmatpush2.msra.mxu0 0.0
      %410 = vmatprep.mubr.f32.mxu0 0.0
      %411 = vmatmul.mubr.f32.gmra.mxu0 %v328
      %v412 = vpop.f32.mrf.mxu0
      %v413 = vadd.f32 %v324, %v412
      %v414 = vpop.f32.mrf.mxu0
      %415 = vmatprep.mubr.f32.mxu0 0.0
      %416 = vmatmul.mubr.f32.gmra.mxu0 %v331
      %v417 = vpop.f32.mrf.mxu0
      %v418 = vadd.f32 %v324, %v417
      %v419 = vpop.f32.mrf.mxu0
      %420 = vmatprep.mubr.f32.mxu0 0.0
      %421 = vmatmul.mubr.f32.gmra.mxu0 %v334
      %v422 = vpop.f32.mrf.mxu0
      %v423 = vadd.f32 %v324, %v422
      %v424 = vpop.f32.mrf.mxu0
      %425 = vmatprep.mubr.f32.mxu0 0.0
      %426 = vmatmul.mubr.f32.gmra.mxu0 %v337
      %v427 = vpop.f32.mrf.mxu0
      %v428 = vadd.f32 %v324, %v427
      %v429 = vpop.f32.mrf.mxu0
      %430 = vmatprep.mubr.f32.mxu0 0.0
      %431 = vmatmul.mubr.f32.gmra.mxu0 %v340
      %v432 = vpop.f32.mrf.mxu0
      %v433 = vadd.f32 %v324, %v432
      %v434 = vpop.f32.mrf.mxu0
      %435 = vdwg.mxu0
      %v436 = vxor.u32 %v413, 2147483648
      %v437 = vxor.u32 %v418, 2147483648
      %v438 = vxor.u32 %v423, 2147483648
      %v439 = vxor.u32 %v428, 2147483648
      %v440 = vxor.u32 %v433, 2147483648
      %v441 = vmul.f32 %v436, 1.442695
      %v442 = vpow.pop %v441
      %v443 = vmul.f32 %v437, 1.442695
      %v444 = vpow.pop %v443
      %v445 = vmul.f32 %v438, 1.442695
      %v446 = vpow.pop %v445
      %v447 = vmul.f32 %v439, 1.442695
      %v448 = vpow.pop %v447
      %v449 = vmul.f32 %v440, 1.442695
      %v450 = vpow.pop %v449
      %v451 = vadd.f32 %v442, 1.0
      %v452 = vadd.f32 %v444, 1.0
      %v453 = vadd.f32 %v446, 1.0
      %v454 = vadd.f32 %v448, 1.0
      %v455 = vadd.f32 %v450, 1.0
      %v456 = vrcp.pop %v451
      %v457 = vmul.f32 1.0, %v456
      %v458 = vrcp.pop %v452
      %v459 = vmul.f32 1.0, %v458
      %v460 = vrcp.pop %v453
      %v461 = vmul.f32 1.0, %v460
      %v462 = vrcp.pop %v454
      %v463 = vmul.f32 1.0, %v462
      %v464 = vrcp.pop %v455
      %v465 = vmul.f32 1.0, %v464
      %v466 = vmul.f32 %v413, %v457
      %v467 = vmul.f32 %v418, %v459
      %v468 = vmul.f32 %v423, %v461
      %v469 = vmul.f32 %v428, %v463
      %v470 = vmul.f32 %v433, %v465
      %v471 = vpack.c.bf16 %v467, %v466
      %v472 = vpack.c.bf16 %v469, %v468
      %v473 = vpack.c.bf16 %v470, %v470
      %v474 = vld [vmem:[%s3] sm:$0xf]
      %v475 = vld [vmem:[%s3 + $0x4] sm:$0xf]
      %v476 = vld [vmem:[%s3 + $0x8] sm:$0xf]
      %v477 = vld [vmem:[%s3 + $0xc] sm:$0xf]
      %v478 = vld [vmem:[%s3 + $0x10] sm:$0xf]
      %v479 = vld [vmem:[%s3 + $0x14] sm:$0xf]
      %v480 = vld [vmem:[%s3 + $0x18] sm:$0xf]
      %v481 = vld [vmem:[%s3 + $0x1c] sm:$0xf]
      %v482 = vld [vmem:[%s3 + $0x20] sm:$0xf]
      %v483 = vld [vmem:[%s3 + $0x24] sm:$0xf]
      %v484 = vld [vmem:[%s3 + $0x28] sm:$0xf]
      %v485 = vld [vmem:[%s3 + $0x2c] sm:$0xf]
      %v486 = vld [vmem:[%s3 + $0x30] sm:$0xf]
      %v487 = vld [vmem:[%s3 + $0x34] sm:$0xf]
      %v488 = vld [vmem:[%s3 + $0x38] sm:$0xf]
      %v489 = vld [vmem:[%s3 + $0x3c] sm:$0xf]
      %v490 = vld [vmem:[%s4] sm:$0x1]
      %v492 = vlaneseq
      %v493 = vshrl.u32 %v492, 7
      %v494 = vsub.s32 0, %v493
      %v495 = vrot.slane %v490, %v494
      %v513 = vunpack.c.l.b16 %v474
      %v514 = vunpack.c.l.b16 %v475
      %v515 = vunpack.c.l.b16 %v476
      %v516 = vunpack.c.l.b16 %v477
      %v517 = vunpack.c.l.b16 %v478
      %v518 = vunpack.c.l.b16 %v479
      %v519 = vunpack.c.l.b16 %v480
      %v520 = vunpack.c.l.b16 %v481
      %v521 = vunpack.c.l.b16 %v482
      %v522 = vunpack.c.l.b16 %v483
      %v523 = vunpack.c.l.b16 %v484
      %v524 = vunpack.c.l.b16 %v485
      %v525 = vunpack.c.l.b16 %v486
      %v526 = vunpack.c.l.b16 %v487
      %v527 = vunpack.c.l.b16 %v488
      %v528 = vunpack.c.l.b16 %v489
      %v529 = vpack.c.b16 %v514, %v513
      %v530 = vpack.c.b16 %v516, %v515
      %v531 = vpack.c.b16 %v518, %v517
      %v532 = vpack.c.b16 %v520, %v519
      %v533 = vpack.c.b16 %v522, %v521
      %v534 = vpack.c.b16 %v524, %v523
      %v535 = vpack.c.b16 %v526, %v525
      %v536 = vpack.c.b16 %v528, %v527
      %545 = vmatprep.subr.bf16.mxu0 0
      %546 = vmatpush1.bf16.msra.mxu0 %v536
      %547 = vmatprep.subr.bf16.mxu0 0
      %548 = vmatpush1.bf16.msra.mxu0 %v535
      %549 = vmatprep.subr.bf16.mxu0 0
      %550 = vmatpush1.bf16.msra.mxu0 %v534
      %551 = vmatprep.subr.bf16.mxu0 0
      %552 = vmatpush1.bf16.msra.mxu0 %v533
      %553 = vmatprep.subr.bf16.mxu0 0
      %554 = vmatpush1.bf16.msra.mxu0 %v532
      %555 = vmatprep.subr.bf16.mxu0 0
      %556 = vmatpush1.bf16.msra.mxu0 %v531
      %557 = vmatprep.subr.bf16.mxu0 0
      %558 = vmatpush1.bf16.msra.mxu0 %v530
      %559 = vmatprep.subr.bf16.mxu0 0
      %560 = vmatpush1.bf16.msra.mxu0 %v529
      %561 = vmatprep.subr.bf16.mxu0 0
      %562 = vmatpush2.bf16.msra.mxu0 0
      %563 = vmatprep.subr.bf16.mxu0 0
      %564 = vmatpush2.bf16.msra.mxu0 0
      %565 = vmatprep.subr.bf16.mxu0 0
      %566 = vmatpush2.bf16.msra.mxu0 0
      %567 = vmatprep.subr.bf16.mxu0 0
      %568 = vmatpush2.bf16.msra.mxu0 0
      %569 = vmatprep.subr.bf16.mxu0 0
      %570 = vmatpush2.bf16.msra.mxu0 0
      %571 = vmatprep.subr.bf16.mxu0 0
      %572 = vmatpush2.bf16.msra.mxu0 0
      %573 = vmatprep.subr.bf16.mxu0 0
      %574 = vmatpush2.bf16.msra.mxu0 0
      %575 = vmatprep.subr.bf16.mxu0 0
      %576 = vmatpush2.bf16.msra.mxu0 0
      %577 = vmatprep.mubr.bf16.mxu0 0
      %578 = vmatmul.mubr.bf16.gmra.mxu0 %v471
      %v579 = vpop.f32.mrf.mxu0
      %v580 = vadd.f32 %v495, %v579
      %v581 = vpop.f32.mrf.mxu0
      %v582 = vpop.f32.mrf.mxu0
      %v583 = vadd.f32 %v495, %v582
      %v584 = vpop.f32.mrf.mxu0
      %585 = vmatprep.mubr.bf16.mxu0 0
      %586 = vmatmul.mubr.bf16.gmra.mxu0 %v472
      %v587 = vpop.f32.mrf.mxu0
      %v588 = vadd.f32 %v495, %v587
      %v589 = vpop.f32.mrf.mxu0
      %v590 = vpop.f32.mrf.mxu0
      %v591 = vadd.f32 %v495, %v590
      %v592 = vpop.f32.mrf.mxu0
      %593 = vmatprep.mubr.bf16.mxu0 0
      %594 = vmatmul.mubr.bf16.gmra.mxu0 %v473
      %v595 = vpop.f32.mrf.mxu0
      %v596 = vadd.f32 %v495, %v595
      %v597 = vpop.f32.mrf.mxu0
      %v598 = vpop.f32.mrf.mxu0
      %v599 = vpop.f32.mrf.mxu0
      %600 = vdwg.mxu0
      %v601 = vxor.u32 %v580, 2147483648
      %v602 = vxor.u32 %v583, 2147483648
      %v603 = vxor.u32 %v588, 2147483648
      %v604 = vxor.u32 %v591, 2147483648
      %v605 = vxor.u32 %v596, 2147483648
      %v606 = vmul.f32 %v601, 1.442695
      %v607 = vpow.pop %v606
      %v608 = vmul.f32 %v602, 1.442695
      %v609 = vpow.pop %v608
      %v610 = vmul.f32 %v603, 1.442695
      %v611 = vpow.pop %v610
      %v612 = vmul.f32 %v604, 1.442695
      %v613 = vpow.pop %v612
      %v614 = vmul.f32 %v605, 1.442695
      %v615 = vpow.pop %v614
      %v616 = vadd.f32 %v607, 1.0
      %v617 = vadd.f32 %v609, 1.0
      %v618 = vadd.f32 %v611, 1.0
      %v619 = vadd.f32 %v613, 1.0
      %v620 = vadd.f32 %v615, 1.0
      %v621 = vrcp.pop %v616
      %v622 = vmul.f32 1.0, %v621
      %v623 = vrcp.pop %v617
      %v624 = vmul.f32 1.0, %v623
      %v625 = vrcp.pop %v618
      %v626 = vmul.f32 1.0, %v625
      %v627 = vrcp.pop %v619
      %v628 = vmul.f32 1.0, %v627
      %v629 = vrcp.pop %v620
      %v630 = vmul.f32 1.0, %v629
      %v631 = vmul.f32 %v580, %v622
      %v632 = vmul.f32 %v583, %v624
      %v633 = vmul.f32 %v588, %v626
      %v634 = vmul.f32 %v591, %v628
      %v635 = vmul.f32 %v596, %v630
      %s636 = smul.u32 %s23, 32
      %s637 = ssub.s32 %s636, 1
      %v638 = vlaneseq
      %v639 = vshrl.u32 %v638, 7
      %v640 = vadd.s32 %v639, 8
      %v641 = vadd.s32 %v639, 16
      %v642 = vadd.s32 %v639, 24
      %v643 = vadd.s32 %v639, 32
      %v644 = vstv %s637
      %v645 = vadd.s32 %v644, %v639
      %v646 = vadd.s32 %v644, %v640
      %v647 = vadd.s32 %v644, %v641
      %v648 = vadd.s32 %v644, %v642
      %v649 = vadd.s32 %v644, %v643
      %vm650 = vcmp.ge.s32.totalorder %v645, 0
      %vm651 = vcmp.ge.s32.totalorder %v646, 0
      %vm652 = vcmp.ge.s32.totalorder %v647, 0
      %vm653 = vcmp.ge.s32.totalorder %v648, 0
      %vm654 = vcmp.ge.s32.totalorder %v649, 0
      %vm655 = vcmp.lt.s32.totalorder %v645, 64
      %vm656 = vcmp.lt.s32.totalorder %v646, 64
      %vm657 = vcmp.lt.s32.totalorder %v647, 64
      %vm658 = vcmp.lt.s32.totalorder %v648, 64
      %vm659 = vcmp.lt.s32.totalorder %v649, 64
      %vm660 = vmand %vm650, %vm655
      %vm661 = vmand %vm651, %vm656
      %vm662 = vmand %vm652, %vm657
      %vm663 = vmand %vm653, %vm658
      %vm664 = vmand %vm654, %vm659
      %v665 = vsel %vm660, 1, 0
      %v666 = vsel %vm661, 1, 0
      %v667 = vsel %vm662, 1, 0
      %v668 = vsel %vm663, 1, 0
      %v669 = vsel %vm664, 1, 0
      %vm670 = vcmp.eq.s32.totalorder %v665, 1
      %vm671 = vcmp.eq.s32.totalorder %v666, 1
      %vm672 = vcmp.eq.s32.totalorder %v667, 1
      %vm673 = vcmp.eq.s32.totalorder %v668, 1
      %vm674 = vcmp.eq.s32.totalorder %v669, 1
      %v675 = vsel %vm670, %v631, 0.0
      %v676 = vsel %vm671, %v632, 0.0
      %v677 = vsel %vm672, %v633, 0.0
      %v678 = vsel %vm673, %v634, 0.0
      %v679 = vsel %vm674, %v635, 0.0
      %v680 = vld [vmem:[%s5] sm:$0x1]
      %v681 = vlaneseq
      %v682 = vshrl.u32 %v681, 7
      %v683 = vsub.s32 0, %v682
      %v684 = vrot.slane %v680, %v683
      %v685 = vmul.f32 %v675, %v684
      %v686 = vmul.f32 %v676, %v684
      %v687 = vmul.f32 %v677, %v684
      %v688 = vmul.f32 %v678, %v684
      %v689 = vld [vmem:[%s5 + $0x1] sm:$0x1]
      %v690 = vlaneseq
      %v691 = vshrl.u32 %v690, 7
      %v692 = vsub.s32 0, %v691
      %v693 = vrot.slane %v689, %v692
      %v694 = vmul.f32 %v675, %v693
      %v695 = vmul.f32 %v676, %v693
      %v696 = vmul.f32 %v677, %v693
      %v697 = vmul.f32 %v678, %v693
      %v698 = vmul.f32 %v679, %v693
      %vm704 = vcmask 1046528
      %v705 = vrot.slane %v694, 1
      %v706 = vrot.slane %v695, 1
      %v707 = vsel %vm704, %v705, %v706
      %v708 = vrot.slane %v696, 1
      %v709 = vsel %vm704, %v706, %v708
      %v710 = vrot.slane %v697, 1
      %v711 = vsel %vm704, %v708, %v710
      %v712 = vrot.slane %v698, 1
      %v713 = vsel %vm704, %v710, %v712
      %v718 = vadd.f32 %v685, %v707
      %v719 = vadd.f32 %v686, %v709
      %v720 = vadd.f32 %v687, %v711
      %v721 = vadd.f32 %v688, %v713
      %v722 = vld [vmem:[%s5 + $0x2] sm:$0x1]
      %v723 = vlaneseq
      %v724 = vshrl.u32 %v723, 7
      %v725 = vsub.s32 0, %v724
      %v726 = vrot.slane %v722, %v725
      %v727 = vmul.f32 %v675, %v726
      %v728 = vmul.f32 %v676, %v726
      %v729 = vmul.f32 %v677, %v726
      %v730 = vmul.f32 %v678, %v726
      %v731 = vmul.f32 %v679, %v726
      %vm737 = vcmask 1045504
      %v738 = vrot.slane %v727, 2
      %v739 = vrot.slane %v728, 2
      %v740 = vsel %vm737, %v738, %v739
      %v741 = vrot.slane %v729, 2
      %v742 = vsel %vm737, %v739, %v741
      %v743 = vrot.slane %v730, 2
      %v744 = vsel %vm737, %v741, %v743
      %v745 = vrot.slane %v731, 2
      %v746 = vsel %vm737, %v743, %v745
      %v751 = vadd.f32 %v718, %v740
      %v752 = vadd.f32 %v719, %v742
      %v753 = vadd.f32 %v720, %v744
      %v754 = vadd.f32 %v721, %v746
      %v755 = vld [vmem:[%s6] sm:$0x1]
      %v757 = vlaneseq
      %v758 = vshrl.u32 %v757, 7
      %v759 = vsub.s32 0, %v758
      %v760 = vrot.slane %v755, %v759
      %v762 = vadd.f32 %v751, %v760
      %v763 = vadd.f32 %v752, %v760
      %v764 = vadd.f32 %v753, %v760
      %v765 = vadd.f32 %v754, %v760
      %v766 = vxor.u32 %v762, 2147483648
      %v767 = vxor.u32 %v763, 2147483648
      %v768 = vxor.u32 %v764, 2147483648
      %v769 = vxor.u32 %v765, 2147483648
      %v770 = vmul.f32 %v766, 1.442695
      %v771 = vpow.pop %v770
      %v772 = vmul.f32 %v767, 1.442695
      %v773 = vpow.pop %v772
      %v774 = vmul.f32 %v768, 1.442695
      %v775 = vpow.pop %v774
      %v776 = vmul.f32 %v769, 1.442695
      %v777 = vpow.pop %v776
      %v778 = vadd.f32 %v771, 1.0
      %v779 = vadd.f32 %v773, 1.0
      %v780 = vadd.f32 %v775, 1.0
      %v781 = vadd.f32 %v777, 1.0
      %v782 = vrcp.pop %v778
      %v783 = vmul.f32 1.0, %v782
      %v784 = vrcp.pop %v779
      %v785 = vmul.f32 1.0, %v784
      %v786 = vrcp.pop %v780
      %v787 = vmul.f32 1.0, %v786
      %v788 = vrcp.pop %v781
      %v789 = vmul.f32 1.0, %v788
      %v790 = vmul.f32 %v762, %v783
      %v791 = vmul.f32 %v763, %v785
      %v792 = vmul.f32 %v764, %v787
      %v793 = vmul.f32 %v765, %v789
      %v794 = vadd.f32 %v790, %v791
      %v795 = vadd.f32 %v794, %v792
      %v796 = vadd.f32 %v795, %v793
      %v797 = vrot.slane %v796, 4
      %v798 = vadd.f32 %v796, %v797
      %v799 = vrot.slane %v798, 2
      %v800 = vadd.f32 %v798, %v799
      %v801 = vrot.slane %v800, 1
      %v802 = vadd.f32 %v800, %v801
      %803 = vst [vmem:[%s310] sm:$0x1] %v802
      %p804 = scmp.lt.s32.totalorder %s23, 1
      %s805 = scalar_select %p804, %s23, 1
      %p806 = scmp.lt.s32.totalorder %s22, 1
      %s807 = scalar_select %p806, %s22, 1
      %s808 = smul.addr %s805, 2
      %s809 = sadd.s32 %s807, %s808
      %s810 = scalar_lea.vmem %s7, %s809
      // Predicated region
      $region49: #{efficientnet_forward.2} parent=47 // pred_check
        %p811 = pneg %p204
      $region50: #{efficientnet_forward.2} parent=47 // pred_check_branch
        %813 = sbr.rel (%p811) target = $region52
      $region51: #{efficientnet_forward.2} parent=47 // pred_region
        _
      $region52: #{efficientnet_forward.2} parent=47 // pred_fallthru
        _
    $region48: #{efficientnet_forward.2} parent=5 // pred_fallthru
      _
    %p814 = scmp.le.s32.totalorder 2, %s13
    // Predicated region
    $region53: #{efficientnet_forward.2} parent=5 // pred_check
      %p815 = pneg %p814
    $region54: #{efficientnet_forward.2} parent=5 // pred_check_branch
      %817 = sbr.rel (%p815) target = $region56
    $region55: #{efficientnet_forward.2} parent=5 // pred_region
      %s818 = ssub.s32 %s13, 2
      // Predicated region
      $region57: #{efficientnet_forward.2} parent=55 // pred_check
        %p819 = pneg %p210
      $region58: #{efficientnet_forward.2} parent=55 // pred_check_branch
        %821 = sbr.rel (%p819) target = $region60
      $region59: #{efficientnet_forward.2} parent=55 // pred_region
        %p822 = scmp.lt.s32.totalorder %s25, 1
        %s823 = scalar_select %p822, %s25, 1
        %p824 = scmp.lt.s32.totalorder %s24, 1
        %s825 = scalar_select %p824, %s24, 1
        %s826 = smul.addr %s823, 2
        %s827 = sadd.s32 %s825, %s826
        %s828 = scalar_lea.vmem %s7, %s827
      $region60: #{efficientnet_forward.2} parent=55 // pred_fallthru
        _
    $region56: #{efficientnet_forward.2} parent=5 // pred_fallthru
      _
  $region6: #{efficientnet_forward.2} parent=0 // loop_footer
    %s17 = sadd.s32 1, %s13
  $region7: #{efficientnet_forward.2} parent=0 // loop_footer_branch
    %12 = sbr.rel target = $region3
  $region8: #{efficientnet_forward.2} parent=0 // loop_exit
    _

// kernel: efficientnet_forward.3
$region0: #{efficientnet_forward.3}
  #allocation0 [shape = 'u32[]', space=smem, size = 0x4, offset = 0x4, fixed_abs, tag = 'smem constant byte address 0x4 - core index']
  #allocation1 [shape = 'u32[144,128]{1,0:T(1,128)}', space=vmem, size = 0x12000, scoped, tag = 'internal scratch']
  %s0 = inlined_call_operand.vmem [shape: f32[2,2,34,12], index: 0, kind: input, shape index: {}]
  %s1 = inlined_call_operand.vmem [shape: f32[12,128], index: 1, kind: input, shape index: {}]
  %s2 = inlined_call_operand.vmem [shape: f32[1,128], index: 2, kind: input, shape index: {}]
  %s3 = inlined_call_operand.vmem [shape: bf16[128,128], index: 3, kind: input, shape index: {}]
  %s4 = inlined_call_operand.vmem [shape: f32[1,128], index: 4, kind: input, shape index: {}]
  %s5 = inlined_call_operand.vmem [shape: f32[3,128], index: 5, kind: input, shape index: {}]
  %s6 = inlined_call_operand.vmem [shape: f32[1,128], index: 6, kind: input, shape index: {}]
  %s7 = inlined_call_operand.vmem [shape: f32[2,1,128], index: 7, kind: input, shape index: {}]
  %s8 = inlined_call_operand.vmem [shape: bf16[128,128], index: 8, kind: input, shape index: {}]
  %s9 = inlined_call_operand.vmem [shape: f32[1,128], index: 9, kind: input, shape index: {}]
  %s10 = inlined_call_operand.vmem [shape: bf16[128,128], index: 10, kind: input, shape index: {}]
  %s11 = inlined_call_operand.vmem [shape: f32[1,128], index: 11, kind: input, shape index: {}]
  %s12 = inlined_call_operand.vmem [shape: f32[2,2,1,128], index: 12, kind: output, shape index: {}]
  %s13 = sld [smem:[#allocation0]]
  $region81: #{efficientnet_forward.3} parent=0
    _
  %s15 = ssub.s32 1, %s13
  %s16 = scalar_select 0, %s15, %s13
  loop: start=0, step=1, limit=6
  $region2: #{efficientnet_forward.3} parent=0 // loop_pre_header
    _
  $region3: #{efficientnet_forward.3} parent=0 // loop_header
    %s18 = sphi 0, %s22
    %p19 = scmp.ge.s32.totalorder %s18, 6
    %s25 = sphi 0, %s37
    %s26 = sphi 0, %s33
    %s27 = sphi 0, %s25
    %s28 = sphi 0, %s26
    %s29 = sphi 0, %s27
    %s30 = sphi 0, %s28
    %s42 = sphi 0, %s44
    %s45 = sphi 0, %s42
    %s46 = sphi 0, %s45
    %s62 = sphi 0, %s46
    %s66 = sphi 0, %s66
    %s68 = sphi 0, %s66
    %s69 = sphi 0, %s68
    %s83 = sphi 0, %s69
    %s87 = sphi 0, %s87
    %s89 = sphi 0, %s87
    %s90 = sphi 0, %s89
    %s104 = sphi 0, %s90
    %s108 = sphi 0, %s108
    %s110 = sphi 0, %s108
    %s111 = sphi 0, %s110
    %s125 = sphi 0, %s111
    %s129 = sphi 0, %s129
    %s131 = sphi 0, %s129
    %s132 = sphi 0, %s131
    %s146 = sphi 0, %s132
    %s150 = sphi 0, %s150
    %s152 = sphi 0, %s150
    %s153 = sphi 0, %s152
    %s167 = sphi 0, %s153
    %s171 = sphi 0, %s171
    %s173 = sphi 0, %s171
    %s174 = sphi 0, %s173
    %s188 = sphi 0, %s174
    %s194 = sphi 0, %s196
    %s197 = sphi 0, %s194
    %s198 = sphi 0, %s197
    %s214 = sphi 0, %s198
    %s218 = sphi 0, %s218
    %s220 = sphi 0, %s218
    %s221 = sphi 0, %s220
    %s235 = sphi 0, %s221
    %s239 = sphi 0, %s239
    %s241 = sphi 0, %s239
    %s242 = sphi 0, %s241
    %s256 = sphi 0, %s242
    %s260 = sphi 0, %s260
    %s262 = sphi 0, %s260
    %s263 = sphi 0, %s262
    %s277 = sphi 0, %s263
    %s281 = sphi 0, %s281
    %s283 = sphi 0, %s281
    %s284 = sphi 0, %s283
    %s298 = sphi 0, %s284
    %s306 = sphi 0, %s308
    %s309 = sphi 0, %s306
    %s310 = sphi 0, %s309
    %s326 = sphi 0, %s310
  $region4: #{efficientnet_forward.3} parent=0 // loop_header_branch
    %21 = sbr.rel (%p19) target = $region8
  $region5: #{efficientnet_forward.3} parent=0 // loop_body
    %s23 = ssub.s32 %s18, 1
    %s24 = ssub.s32 %s18, 2
    %s31 = sadd.s32 1, %s26
    %p32 = scmp.ge.s32.totalorder %s31, 2
    %s33 = scalar_select %p32, 0, %s31
    %s34 = sadd.s32 1, %s25
    %s35 = scalar_select %p32, %s34, %s25
    %p36 = scmp.ge.s32.totalorder %s35, 2
    %s37 = scalar_select %p36, 0, %s35
    %s38 = ssub.s32 %s26, %s33
    %s39 = ssub.s32 %s25, %s37
    %s40 = sor.u32 %s38, %s39
    %p41 = scmp.eq.s32.totalorder %s40, 0
    %s43 = sadd.s32 %s42, 1
    %s44 = scalar_select %p41, %s42, %s43
    %p47 = pneg %p41
    %p48 = scmp.eq.s32.totalorder %s18, 3
    %p49 = por %p47, %p48
    %p50 = scmp.ne.s32.totalorder %s42, %s45
    %p51 = scmp.eq.s32.totalorder %s18, 0
    %p52 = por %p50, %p51
    %p53 = scmp.ne.s32.totalorder %s42, %s45
    %p54 = scmp.eq.s32.totalorder %s23, 3
    %p55 = por %p53, %p54
    %p56 = scmp.ne.s32.totalorder %s45, %s46
    %p57 = scmp.eq.s32.totalorder %s23, 0
    %p58 = por %p56, %p57
    %p59 = scmp.ne.s32.totalorder %s45, %s46
    %p60 = scmp.eq.s32.totalorder %s24, 3
    %p61 = por %p59, %p60
    %p63 = scmp.ne.s32.totalorder %s46, %s62
    %p64 = scmp.eq.s32.totalorder %s24, 0
    %p65 = por %p63, %p64
    %s67 = sadd.s32 %s66, 1
    %p70 = scmp.eq.s32.totalorder %s18, 3
    %p71 = scmp.ne.s32.totalorder %s66, %s68
    %p72 = scmp.eq.s32.totalorder %s18, 0
    %p73 = por %p71, %p72
    %p74 = scmp.ne.s32.totalorder %s66, %s68
    %p75 = scmp.eq.s32.totalorder %s23, 3
    %p76 = por %p74, %p75
    %p77 = scmp.ne.s32.totalorder %s68, %s69
    %p78 = scmp.eq.s32.totalorder %s23, 0
    %p79 = por %p77, %p78
    %p80 = scmp.ne.s32.totalorder %s68, %s69
    %p81 = scmp.eq.s32.totalorder %s24, 3
    %p82 = por %p80, %p81
    %p84 = scmp.ne.s32.totalorder %s69, %s83
    %p85 = scmp.eq.s32.totalorder %s24, 0
    %p86 = por %p84, %p85
    %s88 = sadd.s32 %s87, 1
    %p91 = scmp.eq.s32.totalorder %s18, 3
    %p92 = scmp.ne.s32.totalorder %s87, %s89
    %p93 = scmp.eq.s32.totalorder %s18, 0
    %p94 = por %p92, %p93
    %p95 = scmp.ne.s32.totalorder %s87, %s89
    %p96 = scmp.eq.s32.totalorder %s23, 3
    %p97 = por %p95, %p96
    %p98 = scmp.ne.s32.totalorder %s89, %s90
    %p99 = scmp.eq.s32.totalorder %s23, 0
    %p100 = por %p98, %p99
    %p101 = scmp.ne.s32.totalorder %s89, %s90
    %p102 = scmp.eq.s32.totalorder %s24, 3
    %p103 = por %p101, %p102
    %p105 = scmp.ne.s32.totalorder %s90, %s104
    %p106 = scmp.eq.s32.totalorder %s24, 0
    %p107 = por %p105, %p106
    %s109 = sadd.s32 %s108, 1
    %p112 = scmp.eq.s32.totalorder %s18, 3
    %p113 = scmp.ne.s32.totalorder %s108, %s110
    %p114 = scmp.eq.s32.totalorder %s18, 0
    %p115 = por %p113, %p114
    %p116 = scmp.ne.s32.totalorder %s108, %s110
    %p117 = scmp.eq.s32.totalorder %s23, 3
    %p118 = por %p116, %p117
    %p119 = scmp.ne.s32.totalorder %s110, %s111
    %p120 = scmp.eq.s32.totalorder %s23, 0
    %p121 = por %p119, %p120
    %p122 = scmp.ne.s32.totalorder %s110, %s111
    %p123 = scmp.eq.s32.totalorder %s24, 3
    %p124 = por %p122, %p123
    %p126 = scmp.ne.s32.totalorder %s111, %s125
    %p127 = scmp.eq.s32.totalorder %s24, 0
    %p128 = por %p126, %p127
    %s130 = sadd.s32 %s129, 1
    %p133 = scmp.eq.s32.totalorder %s18, 3
    %p134 = scmp.ne.s32.totalorder %s129, %s131
    %p135 = scmp.eq.s32.totalorder %s18, 0
    %p136 = por %p134, %p135
    %p137 = scmp.ne.s32.totalorder %s129, %s131
    %p138 = scmp.eq.s32.totalorder %s23, 3
    %p139 = por %p137, %p138
    %p140 = scmp.ne.s32.totalorder %s131, %s132
    %p141 = scmp.eq.s32.totalorder %s23, 0
    %p142 = por %p140, %p141
    %p143 = scmp.ne.s32.totalorder %s131, %s132
    %p144 = scmp.eq.s32.totalorder %s24, 3
    %p145 = por %p143, %p144
    %p147 = scmp.ne.s32.totalorder %s132, %s146
    %p148 = scmp.eq.s32.totalorder %s24, 0
    %p149 = por %p147, %p148
    %s151 = sadd.s32 %s150, 1
    %p154 = scmp.eq.s32.totalorder %s18, 3
    %p155 = scmp.ne.s32.totalorder %s150, %s152
    %p156 = scmp.eq.s32.totalorder %s18, 0
    %p157 = por %p155, %p156
    %p158 = scmp.ne.s32.totalorder %s150, %s152
    %p159 = scmp.eq.s32.totalorder %s23, 3
    %p160 = por %p158, %p159
    %p161 = scmp.ne.s32.totalorder %s152, %s153
    %p162 = scmp.eq.s32.totalorder %s23, 0
    %p163 = por %p161, %p162
    %p164 = scmp.ne.s32.totalorder %s152, %s153
    %p165 = scmp.eq.s32.totalorder %s24, 3
    %p166 = por %p164, %p165
    %p168 = scmp.ne.s32.totalorder %s153, %s167
    %p169 = scmp.eq.s32.totalorder %s24, 0
    %p170 = por %p168, %p169
    %s172 = sadd.s32 %s171, 1
    %p175 = scmp.eq.s32.totalorder %s18, 3
    %p176 = scmp.ne.s32.totalorder %s171, %s173
    %p177 = scmp.eq.s32.totalorder %s18, 0
    %p178 = por %p176, %p177
    %p179 = scmp.ne.s32.totalorder %s171, %s173
    %p180 = scmp.eq.s32.totalorder %s23, 3
    %p181 = por %p179, %p180
    %p182 = scmp.ne.s32.totalorder %s173, %s174
    %p183 = scmp.eq.s32.totalorder %s23, 0
    %p184 = por %p182, %p183
    %p185 = scmp.ne.s32.totalorder %s173, %s174
    %p186 = scmp.eq.s32.totalorder %s24, 3
    %p187 = por %p185, %p186
    %p189 = scmp.ne.s32.totalorder %s174, %s188
    %p190 = scmp.eq.s32.totalorder %s24, 0
    %p191 = por %p189, %p190
    %s192 = ssub.s32 %s25, %s37
    %p193 = scmp.eq.s32.totalorder %s192, 0
    %s195 = sadd.s32 %s194, 1
    %s196 = scalar_select %p193, %s194, %s195
    %p199 = pneg %p193
    %p200 = scmp.eq.s32.totalorder %s18, 3
    %p201 = por %p199, %p200
    %p202 = scmp.ne.s32.totalorder %s194, %s197
    %p203 = scmp.eq.s32.totalorder %s18, 0
    %p204 = por %p202, %p203
    %p205 = scmp.ne.s32.totalorder %s194, %s197
    %p206 = scmp.eq.s32.totalorder %s23, 3
    %p207 = por %p205, %p206
    %p208 = scmp.ne.s32.totalorder %s197, %s198
    %p209 = scmp.eq.s32.totalorder %s23, 0
    %p210 = por %p208, %p209
    %p211 = scmp.ne.s32.totalorder %s197, %s198
    %p212 = scmp.eq.s32.totalorder %s24, 3
    %p213 = por %p211, %p212
    %p215 = scmp.ne.s32.totalorder %s198, %s214
    %p216 = scmp.eq.s32.totalorder %s24, 0
    %p217 = por %p215, %p216
    %s219 = sadd.s32 %s218, 1
    %p222 = scmp.eq.s32.totalorder %s18, 3
    %p223 = scmp.ne.s32.totalorder %s218, %s220
    %p224 = scmp.eq.s32.totalorder %s18, 0
    %p225 = por %p223, %p224
    %p226 = scmp.ne.s32.totalorder %s218, %s220
    %p227 = scmp.eq.s32.totalorder %s23, 3
    %p228 = por %p226, %p227
    %p229 = scmp.ne.s32.totalorder %s220, %s221
    %p230 = scmp.eq.s32.totalorder %s23, 0
    %p231 = por %p229, %p230
    %p232 = scmp.ne.s32.totalorder %s220, %s221
    %p233 = scmp.eq.s32.totalorder %s24, 3
    %p234 = por %p232, %p233
    %p236 = scmp.ne.s32.totalorder %s221, %s235
    %p237 = scmp.eq.s32.totalorder %s24, 0
    %p238 = por %p236, %p237
    %s240 = sadd.s32 %s239, 1
    %p243 = scmp.eq.s32.totalorder %s18, 3
    %p244 = scmp.ne.s32.totalorder %s239, %s241
    %p245 = scmp.eq.s32.totalorder %s18, 0
    %p246 = por %p244, %p245
    %p247 = scmp.ne.s32.totalorder %s239, %s241
    %p248 = scmp.eq.s32.totalorder %s23, 3
    %p249 = por %p247, %p248
    %p250 = scmp.ne.s32.totalorder %s241, %s242
    %p251 = scmp.eq.s32.totalorder %s23, 0
    %p252 = por %p250, %p251
    %p253 = scmp.ne.s32.totalorder %s241, %s242
    %p254 = scmp.eq.s32.totalorder %s24, 3
    %p255 = por %p253, %p254
    %p257 = scmp.ne.s32.totalorder %s242, %s256
    %p258 = scmp.eq.s32.totalorder %s24, 0
    %p259 = por %p257, %p258
    %s261 = sadd.s32 %s260, 1
    %p264 = scmp.eq.s32.totalorder %s18, 3
    %p265 = scmp.ne.s32.totalorder %s260, %s262
    %p266 = scmp.eq.s32.totalorder %s18, 0
    %p267 = por %p265, %p266
    %p268 = scmp.ne.s32.totalorder %s260, %s262
    %p269 = scmp.eq.s32.totalorder %s23, 3
    %p270 = por %p268, %p269
    %p271 = scmp.ne.s32.totalorder %s262, %s263
    %p272 = scmp.eq.s32.totalorder %s23, 0
    %p273 = por %p271, %p272
    %p274 = scmp.ne.s32.totalorder %s262, %s263
    %p275 = scmp.eq.s32.totalorder %s24, 3
    %p276 = por %p274, %p275
    %p278 = scmp.ne.s32.totalorder %s263, %s277
    %p279 = scmp.eq.s32.totalorder %s24, 0
    %p280 = por %p278, %p279
    %s282 = sadd.s32 %s281, 1
    %p285 = scmp.eq.s32.totalorder %s18, 3
    %p286 = scmp.ne.s32.totalorder %s281, %s283
    %p287 = scmp.eq.s32.totalorder %s18, 0
    %p288 = por %p286, %p287
    %p289 = scmp.ne.s32.totalorder %s281, %s283
    %p290 = scmp.eq.s32.totalorder %s23, 3
    %p291 = por %p289, %p290
    %p292 = scmp.ne.s32.totalorder %s283, %s284
    %p293 = scmp.eq.s32.totalorder %s23, 0
    %p294 = por %p292, %p293
    %p295 = scmp.ne.s32.totalorder %s283, %s284
    %p296 = scmp.eq.s32.totalorder %s24, 3
    %p297 = por %p295, %p296
    %p299 = scmp.ne.s32.totalorder %s284, %s298
    %p300 = scmp.eq.s32.totalorder %s24, 0
    %p301 = por %p299, %p300
    %s302 = ssub.s32 %s26, %s33
    %s303 = ssub.s32 %s25, %s37
    %s304 = sor.u32 %s302, %s303
    %p305 = scmp.eq.s32.totalorder %s304, 0
    %s307 = sadd.s32 %s306, 1
    %s308 = scalar_select %p305, %s306, %s307
    %p311 = pneg %p305
    %p312 = scmp.eq.s32.totalorder %s18, 3
    %p313 = por %p311, %p312
    %p314 = scmp.ne.s32.totalorder %s306, %s309
    %p315 = scmp.eq.s32.totalorder %s18, 0
    %p316 = por %p314, %p315
    %p317 = scmp.ne.s32.totalorder %s306, %s309
    %p318 = scmp.eq.s32.totalorder %s23, 3
    %p319 = por %p317, %p318
    %p320 = scmp.ne.s32.totalorder %s309, %s310
    %p321 = scmp.eq.s32.totalorder %s23, 0
    %p322 = por %p320, %p321
    %p323 = scmp.ne.s32.totalorder %s309, %s310
    %p324 = scmp.eq.s32.totalorder %s24, 3
    %p325 = por %p323, %p324
    %p327 = scmp.ne.s32.totalorder %s310, %s326
    %p328 = scmp.eq.s32.totalorder %s24, 0
    %p329 = por %p327, %p328
    %p330 = scmp.le.s32.totalorder 1, %s18
    %p331 = scmp.lt.s32.totalorder %s18, 5
    %p332 = pnand %p330, %p331
    %p333 = pneg %p332
    // Predicated region
    $region9: #{efficientnet_forward.3} parent=5 // pred_check
      _
    $region10: #{efficientnet_forward.3} parent=5 // pred_check_branch
      %335 = sbr.rel (%p332) target = $region12
    $region11: #{efficientnet_forward.3} parent=5 // pred_region
      %s336 = ssub.s32 %s18, 1
      // Predicated region
      $region13: #{efficientnet_forward.3} parent=11 // pred_check
        %p337 = pneg %p79
      $region14: #{efficientnet_forward.3} parent=11 // pred_check_branch
        %339 = sbr.rel (%p337) target = $region16
      $region15: #{efficientnet_forward.3} parent=11 // pred_region
        _
      $region16: #{efficientnet_forward.3} parent=11 // pred_fallthru
        _
      // Predicated region
      $region17: #{efficientnet_forward.3} parent=11 // pred_check
        %p340 = pneg %p100
      $region18: #{efficientnet_forward.3} parent=11 // pred_check_branch
        %342 = sbr.rel (%p340) target = $region20
      $region19: #{efficientnet_forward.3} parent=11 // pred_region
        _
      $region20: #{efficientnet_forward.3} parent=11 // pred_fallthru
        _
      // Predicated region
      $region21: #{efficientnet_forward.3} parent=11 // pred_check
        %p343 = pneg %p121
      $region22: #{efficientnet_forward.3} parent=11 // pred_check_branch
        %345 = sbr.rel (%p343) target = $region24
      $region23: #{efficientnet_forward.3} parent=11 // pred_region
        _
      $region24: #{efficientnet_forward.3} parent=11 // pred_fallthru
        _
      // Predicated region
      $region25: #{efficientnet_forward.3} parent=11 // pred_check
        %p346 = pneg %p142
      $region26: #{efficientnet_forward.3} parent=11 // pred_check_branch
        %348 = sbr.rel (%p346) target = $region28
      $region27: #{efficientnet_forward.3} parent=11 // pred_region
        _
      $region28: #{efficientnet_forward.3} parent=11 // pred_fallthru
        _
      // Predicated region
      $region29: #{efficientnet_forward.3} parent=11 // pred_check
        %p349 = pneg %p163
      $region30: #{efficientnet_forward.3} parent=11 // pred_check_branch
        %351 = sbr.rel (%p349) target = $region32
      $region31: #{efficientnet_forward.3} parent=11 // pred_region
        _
      $region32: #{efficientnet_forward.3} parent=11 // pred_fallthru
        _
      // Predicated region
      $region33: #{efficientnet_forward.3} parent=11 // pred_check
        %p352 = pneg %p184
      $region34: #{efficientnet_forward.3} parent=11 // pred_check_branch
        %354 = sbr.rel (%p352) target = $region36
      $region35: #{efficientnet_forward.3} parent=11 // pred_region
        _
      $region36: #{efficientnet_forward.3} parent=11 // pred_fallthru
        _
      // Predicated region
      $region37: #{efficientnet_forward.3} parent=11 // pred_check
        %p355 = pneg %p231
      $region38: #{efficientnet_forward.3} parent=11 // pred_check_branch
        %357 = sbr.rel (%p355) target = $region40
      $region39: #{efficientnet_forward.3} parent=11 // pred_region
        _
      $region40: #{efficientnet_forward.3} parent=11 // pred_fallthru
        _
      // Predicated region
      $region41: #{efficientnet_forward.3} parent=11 // pred_check
        %p358 = pneg %p252
      $region42: #{efficientnet_forward.3} parent=11 // pred_check_branch
        %360 = sbr.rel (%p358) target = $region44
      $region43: #{efficientnet_forward.3} parent=11 // pred_region
        _
      $region44: #{efficientnet_forward.3} parent=11 // pred_fallthru
        _
      // Predicated region
      $region45: #{efficientnet_forward.3} parent=11 // pred_check
        %p361 = pneg %p273
      $region46: #{efficientnet_forward.3} parent=11 // pred_check_branch
        %363 = sbr.rel (%p361) target = $region48
      $region47: #{efficientnet_forward.3} parent=11 // pred_region
        _
      $region48: #{efficientnet_forward.3} parent=11 // pred_fallthru
        _
      // Predicated region
      $region49: #{efficientnet_forward.3} parent=11 // pred_check
        %p364 = pneg %p294
      $region50: #{efficientnet_forward.3} parent=11 // pred_check_branch
        %366 = sbr.rel (%p364) target = $region52
      $region51: #{efficientnet_forward.3} parent=11 // pred_region
        _
      $region52: #{efficientnet_forward.3} parent=11 // pred_fallthru
        _
    $region12: #{efficientnet_forward.3} parent=5 // pred_fallthru
      _
    %p367 = scmp.lt.s32.totalorder %s18, 4
    // Predicated region
    $region53: #{efficientnet_forward.3} parent=5 // pred_check
      %p368 = pneg %p367
    $region54: #{efficientnet_forward.3} parent=5 // pred_check_branch
      %370 = sbr.rel (%p368) target = $region56
    $region55: #{efficientnet_forward.3} parent=5 // pred_region
      // Predicated region
      $region57: #{efficientnet_forward.3} parent=55 // pred_check
        %p371 = pneg %p52
      $region58: #{efficientnet_forward.3} parent=55 // pred_check_branch
        %373 = sbr.rel (%p371) target = $region60
      $region59: #{efficientnet_forward.3} parent=55 // pred_region
        %p374 = scmp.lt.s32.totalorder %s26, 1
        %s375 = scalar_select %p374, %s26, 1
        %p376 = scmp.lt.s32.totalorder %s25, 1
        %s377 = scalar_select %p376, %s25, 1
        %s378 = smul.addr %s377, 5
        %s379 = smul.addr %s375, 10
        %s380 = sadd.s32 %s378, %s379
        %s381 = smul.addr %s380, 8
        %s382 = scalar_lea.vmem %s0, %s381
      $region60: #{efficientnet_forward.3} parent=55 // pred_fallthru
        _
      // Predicated region
      $region61: #{efficientnet_forward.3} parent=55 // pred_check
        %p383 = pneg %p204
      $region62: #{efficientnet_forward.3} parent=55 // pred_check_branch
        %385 = sbr.rel (%p383) target = $region64
      $region63: #{efficientnet_forward.3} parent=55 // pred_region
        %p386 = scmp.lt.s32.totalorder %s25, 1
        %s387 = scalar_select %p386, %s25, 1
        %s388 = scalar_lea.vmem %s7, %s387
      $region64: #{efficientnet_forward.3} parent=55 // pred_fallthru
        _
    $region56: #{efficientnet_forward.3} parent=5 // pred_fallthru
      _
    %p389 = scmp.le.s32.totalorder 1, %s18
    %p390 = scmp.lt.s32.totalorder %s18, 5
    %p391 = pnand %p389, %p390
    %p392 = pneg %p391
    // Predicated region
    $region65: #{efficientnet_forward.3} parent=5 // pred_check
      _
    $region66: #{efficientnet_forward.3} parent=5 // pred_check_branch
      %394 = sbr.rel (%p391) target = $region68
    $region67: #{efficientnet_forward.3} parent=5 // pred_region
      %s395 = ssub.s32 %s18, 1
      %p396 = scmp.lt.s32.totalorder %s28, 1
      %s397 = scalar_select %p396, %s28, 1
      %p398 = scmp.lt.s32.totalorder %s27, 1
      %s399 = scalar_select %p398, %s27, 1
      %s400 = smul.addr %s399, 5
      %s401 = smul.addr %s397, 10
      %s402 = sadd.s32 %s400, %s401
      %s403 = smul.addr %s402, 8
      %s404 = scalar_lea.vmem %s0, %s403
      %p405 = pneg %p58
      %p406 = pneg %p55
      %p407 = pneg %p79
      %p408 = pneg %p76
      %p409 = pneg %p100
      %p410 = pneg %p97
      %p411 = pneg %p121
      %p412 = pneg %p118
      %p413 = pneg %p142
      %p414 = pneg %p139
      %p415 = pneg %p163
      %p416 = pneg %p160
      %p417 = pneg %p184
      %p418 = pneg %p181
      %p419 = scmp.lt.s32.totalorder %s27, 1
      %s420 = scalar_select %p419, %s27, 1
      %s421 = scalar_lea.vmem %s7, %s420
      %p422 = pneg %p210
      %p423 = pneg %p207
      %p424 = pneg %p231
      %p425 = pneg %p228
      %p426 = pneg %p252
      %p427 = pneg %p249
      %p428 = pneg %p273
      %p429 = pneg %p270
      %p430 = pneg %p294
      %p431 = pneg %p291
      %p432 = pneg %p322
      %p433 = pneg %p319
      %p434 = scmp.lt.s32.totalorder %s28, 1
      %s435 = scalar_select %p434, %s28, 1
      %p436 = scmp.lt.s32.totalorder %s27, 1
      %s437 = scalar_select %p436, %s27, 1
      %s438 = smul.addr %s435, 2
      %s439 = sadd.s32 %s437, %s438
      %s440 = scalar_lea.vmem %s12, %s439
      %p441 = scmp.lt.s32.totalorder %s28, 1
      %s442 = scalar_select %p441, %s28, 1
      %p443 = scmp.lt.s32.totalorder %s27, 1
      %s444 = scalar_select %p443, %s27, 1
      %s445 = smul.addr %s444, 5
      %s446 = smul.addr %s442, 10
      %s447 = sadd.s32 %s445, %s446
      %s448 = smul.addr %s447, 8
      %s449 = scalar_lea.vmem %s0, %s448
      %p450 = scmp.lt.s32.totalorder %s27, 1
      %s451 = scalar_select %p450, %s27, 1
      %s452 = scalar_lea.vmem %s7, %s451
      %p453 = scmp.lt.s32.totalorder %s28, 1
      %s454 = scalar_select %p453, %s28, 1
      %p455 = scmp.lt.s32.totalorder %s27, 1
      %s456 = scalar_select %p455, %s27, 1
      %s457 = smul.addr %s454, 2
      %s458 = sadd.s32 %s456, %s457
      %s459 = scalar_lea.vmem %s12, %s458
      %v461 = vld [vmem:[%s449] sm:$0xff]
      %v462 = vld [vmem:[%s449 + $0x8] sm:$0xff]
      %v463 = vld [vmem:[%s449 + $0x10] sm:$0xff]
      %v464 = vld [vmem:[%s449 + $0x18] sm:$0xff]
      %v465 = vld [vmem:[%s449 + $0x20] sm:$0x3]
      %v466 = vld [vmem:[%s1] sm:$0xff]
      %v467 = vld [vmem:[%s1 + $0x8] sm:$0xf]
      %v468 = vld [vmem:[%s2] sm:$0x1]
      %v470 = vlaneseq
      %v471 = vshrl.u32 %v470, 7
      %v472 = vsub.s32 0, %v471
      %v473 = vrot.slane %v468, %v472
      %vm475 = vcmask 97280
      %v477 = vsel %vm475, %v461, 0
      %v480 = vsel %vm475, %v462, 0
      %v483 = vsel %vm475, %v463, 0
      %v486 = vsel %vm475, %v464, 0
      %v489 = vsel %vm475, %v465, 0
      %vm491 = vcmask 1043456
      %v493 = vsel %vm491, %v467, 0
      %495 = vmatprep.subr.mxu0 0.0
      %496 = vmatpush1.msra.mxu0 0.0
      %497 = vmatprep.subr.mxu0 0.0
      %498 = vmatpush1.msra.mxu0 0.0
      %499 = vmatprep.subr.mxu0 0.0
      %500 = vmatpush1.msra.mxu0 0.0
      %501 = vmatprep.subr.mxu0 0.0
      %502 = vmatpush1.msra.mxu0 0.0
      %503 = vmatprep.subr.mxu0 0.0
      %504 = vmatpush1.msra.mxu0 0.0
      %505 = vmatprep.subr.mxu0 0.0
      %506 = vmatpush1.msra.mxu0 0.0
      %507 = vmatprep.subr.mxu0 0.0
      %508 = vmatpush1.msra.mxu0 0.0
      %509 = vmatprep.subr.mxu0 0.0
      %510 = vmatpush1.msra.mxu0 0.0
      %511 = vmatprep.subr.mxu0 0.0
      %512 = vmatpush1.msra.mxu0 0.0
      %513 = vmatprep.subr.mxu0 0.0
      %514 = vmatpush1.msra.mxu0 0.0
      %515 = vmatprep.subr.mxu0 0.0
      %516 = vmatpush1.msra.mxu0 0.0
      %517 = vmatprep.subr.mxu0 0.0
      %518 = vmatpush1.msra.mxu0 0.0
      %519 = vmatprep.subr.mxu0 0.0
      %520 = vmatpush1.msra.mxu0 0.0
      %521 = vmatprep.subr.mxu0 0.0
      %522 = vmatpush1.msra.mxu0 0.0
      %523 = vmatprep.subr.mxu0 0.0
      %524 = vmatpush1.msra.mxu0 %v493
      %525 = vmatprep.subr.mxu0 0.0
      %526 = vmatpush1.msra.mxu0 %v466
      %527 = vmatprep.subr.mxu0 0.0
      %528 = vmatpush2.msra.mxu0 0.0
      %529 = vmatprep.subr.mxu0 0.0
      %530 = vmatpush2.msra.mxu0 0.0
      %531 = vmatprep.subr.mxu0 0.0
      %532 = vmatpush2.msra.mxu0 0.0
      %533 = vmatprep.subr.mxu0 0.0
      %534 = vmatpush2.msra.mxu0 0.0
      %535 = vmatprep.subr.mxu0 0.0
      %536 = vmatpush2.msra.mxu0 0.0
      %537 = vmatprep.subr.mxu0 0.0
      %538 = vmatpush2.msra.mxu0 0.0
      %539 = vmatprep.subr.mxu0 0.0
      %540 = vmatpush2.msra.mxu0 0.0
      %541 = vmatprep.subr.mxu0 0.0
      %542 = vmatpush2.msra.mxu0 0.0
      %543 = vmatprep.subr.mxu0 0.0
      %544 = vmatpush2.msra.mxu0 0.0
      %545 = vmatprep.subr.mxu0 0.0
      %546 = vmatpush2.msra.mxu0 0.0
      %547 = vmatprep.subr.mxu0 0.0
      %548 = vmatpush2.msra.mxu0 0.0
      %549 = vmatprep.subr.mxu0 0.0
      %550 = vmatpush2.msra.mxu0 0.0
      %551 = vmatprep.subr.mxu0 0.0
      %552 = vmatpush2.msra.mxu0 0.0
      %553 = vmatprep.subr.mxu0 0.0
      %554 = vmatpush2.msra.mxu0 0.0
      %555 = vmatprep.subr.mxu0 0.0
      %556 = vmatpush2.msra.mxu0 0.0
      %557 = vmatprep.subr.mxu0 0.0
      %558 = vmatpush2.msra.mxu0 0.0
      %559 = vmatprep.mubr.f32.mxu0 0.0
      %560 = vmatmul.mubr.f32.gmra.mxu0 %v477
      %v561 = vpop.f32.mrf.mxu0
      %v562 = vadd.f32 %v473, %v561
      %v563 = vpop.f32.mrf.mxu0
      %564 = vmatprep.mubr.f32.mxu0 0.0
      %565 = vmatmul.mubr.f32.gmra.mxu0 %v480
      %v566 = vpop.f32.mrf.mxu0
      %v567 = vadd.f32 %v473, %v566
      %v568 = vpop.f32.mrf.mxu0
      %569 = vmatprep.mubr.f32.mxu0 0.0
      %570 = vmatmul.mubr.f32.gmra.mxu0 %v483
      %v571 = vpop.f32.mrf.mxu0
      %v572 = vadd.f32 %v473, %v571
      %v573 = vpop.f32.mrf.mxu0
      %574 = vmatprep.mubr.f32.mxu0 0.0
      %575 = vmatmul.mubr.f32.gmra.mxu0 %v486
      %v576 = vpop.f32.mrf.mxu0
      %v577 = vadd.f32 %v473, %v576
      %v578 = vpop.f32.mrf.mxu0
      %579 = vmatprep.mubr.f32.mxu0 0.0
      %580 = vmatmul.mubr.f32.gmra.mxu0 %v489
      %v581 = vpop.f32.mrf.mxu0
      %v582 = vadd.f32 %v473, %v581
      %v583 = vpop.f32.mrf.mxu0
      %584 = vdwg.mxu0
      %v585 = vxor.u32 %v562, 2147483648
      %v586 = vxor.u32 %v567, 2147483648
      %v587 = vxor.u32 %v572, 2147483648
      %v588 = vxor.u32 %v577, 2147483648
      %v589 = vxor.u32 %v582, 2147483648
      %v590 = vmul.f32 %v585, 1.442695
      %v591 = vpow.pop %v590
      %v592 = vmul.f32 %v586, 1.442695
      %v593 = vpow.pop %v592
      %v594 = vmul.f32 %v587, 1.442695
      %v595 = vpow.pop %v594
      %v596 = vmul.f32 %v588, 1.442695
      %v597 = vpow.pop %v596
      %v598 = vmul.f32 %v589, 1.442695
      %v599 = vpow.pop %v598
      %v600 = vadd.f32 %v591, 1.0
      %v601 = vadd.f32 %v593, 1.0
      %v602 = vadd.f32 %v595, 1.0
      %v603 = vadd.f32 %v597, 1.0
      %v604 = vadd.f32 %v599, 1.0
      %v605 = vrcp.pop %v600
      %v606 = vmul.f32 1.0, %v605
      %v607 = vrcp.pop %v601
      %v608 = vmul.f32 1.0, %v607
      %v609 = vrcp.pop %v602
      %v610 = vmul.f32 1.0, %v609
      %v611 = vrcp.pop %v603
      %v612 = vmul.f32 1.0, %v611
      %v613 = vrcp.pop %v604
      %v614 = vmul.f32 1.0, %v613
      %v615 = vmul.f32 %v562, %v606
      %v616 = vmul.f32 %v567, %v608
      %v617 = vmul.f32 %v572, %v610
      %v618 = vmul.f32 %v577, %v612
      %v619 = vmul.f32 %v582, %v614
      %v620 = vpack.c.bf16 %v616, %v615
      %v621 = vpack.c.bf16 %v618, %v617
      %v622 = vpack.c.bf16 %v619, %v619
      %v623 = vld [vmem:[%s3] sm:$0xf]
      %v624 = vld [vmem:[%s3 + $0x4] sm:$0xf]
      %v625 = vld [vmem:[%s3 + $0x8] sm:$0xf]
      %v626 = vld [vmem:[%s3 + $0xc] sm:$0xf]
      %v627 = vld [vmem:[%s3 + $0x10] sm:$0xf]
      %v628 = vld [vmem:[%s3 + $0x14] sm:$0xf]
      %v629 = vld [vmem:[%s3 + $0x18] sm:$0xf]
      %v630 = vld [vmem:[%s3 + $0x1c] sm:$0xf]
      %v631 = vld [vmem:[%s3 + $0x20] sm:$0xf]
      %v632 = vld [vmem:[%s3 + $0x24] sm:$0xf]
      %v633 = vld [vmem:[%s3 + $0x28] sm:$0xf]
      %v634 = vld [vmem:[%s3 + $0x2c] sm:$0xf]
      %v635 = vld [vmem:[%s3 + $0x30] sm:$0xf]
      %v636 = vld [vmem:[%s3 + $0x34] sm:$0xf]
      %v637 = vld [vmem:[%s3 + $0x38] sm:$0xf]
      %v638 = vld [vmem:[%s3 + $0x3c] sm:$0xf]
      %v639 = vld [vmem:[%s4] sm:$0x1]
      %v641 = vlaneseq
      %v642 = vshrl.u32 %v641, 7
      %v643 = vsub.s32 0, %v642
      %v644 = vrot.slane %v639, %v643
      %v662 = vunpack.c.l.b16 %v623
      %v663 = vunpack.c.l.b16 %v624
      %v664 = vunpack.c.l.b16 %v625
      %v665 = vunpack.c.l.b16 %v626
      %v666 = vunpack.c.l.b16 %v627
      %v667 = vunpack.c.l.b16 %v628
      %v668 = vunpack.c.l.b16 %v629
      %v669 = vunpack.c.l.b16 %v630
      %v670 = vunpack.c.l.b16 %v631
      %v671 = vunpack.c.l.b16 %v632
      %v672 = vunpack.c.l.b16 %v633
      %v673 = vunpack.c.l.b16 %v634
      %v674 = vunpack.c.l.b16 %v635
      %v675 = vunpack.c.l.b16 %v636
      %v676 = vunpack.c.l.b16 %v637
      %v677 = vunpack.c.l.b16 %v638
      %v678 = vpack.c.b16 %v663, %v662
      %v679 = vpack.c.b16 %v665, %v664
      %v680 = vpack.c.b16 %v667, %v666
      %v681 = vpack.c.b16 %v669, %v668
      %v682 = vpack.c.b16 %v671, %v670
      %v683 = vpack.c.b16 %v673, %v672
      %v684 = vpack.c.b16 %v675, %v674
      %v685 = vpack.c.b16 %v677, %v676
      %694 = vmatprep.subr.bf16.mxu0 0
      %695 = vmatpush1.bf16.msra.mxu0 %v685
      %696 = vmatprep.subr.bf16.mxu0 0
      %697 = vmatpush1.bf16.msra.mxu0 %v684
      %698 = vmatprep.subr.bf16.mxu0 0
      %699 = vmatpush1.bf16.msra.mxu0 %v683
      %700 = vmatprep.subr.bf16.mxu0 0
      %701 = vmatpush1.bf16.msra.mxu0 %v682
      %702 = vmatprep.subr.bf16.mxu0 0
      %703 = vmatpush1.bf16.msra.mxu0 %v681
      %704 = vmatprep.subr.bf16.mxu0 0
      %705 = vmatpush1.bf16.msra.mxu0 %v680
      %706 = vmatprep.subr.bf16.mxu0 0
      %707 = vmatpush1.bf16.msra.mxu0 %v679
      %708 = vmatprep.subr.bf16.mxu0 0
      %709 = vmatpush1.bf16.msra.mxu0 %v678
      %710 = vmatprep.subr.bf16.mxu0 0
      %711 = vmatpush2.bf16.msra.mxu0 0
      %712 = vmatprep.subr.bf16.mxu0 0
      %713 = vmatpush2.bf16.msra.mxu0 0
      %714 = vmatprep.subr.bf16.mxu0 0
      %715 = vmatpush2.bf16.msra.mxu0 0
      %716 = vmatprep.subr.bf16.mxu0 0
      %717 = vmatpush2.bf16.msra.mxu0 0
      %718 = vmatprep.subr.bf16.mxu0 0
      %719 = vmatpush2.bf16.msra.mxu0 0
      %720 = vmatprep.subr.bf16.mxu0 0
      %721 = vmatpush2.bf16.msra.mxu0 0
      %722 = vmatprep.subr.bf16.mxu0 0
      %723 = vmatpush2.bf16.msra.mxu0 0
      %724 = vmatprep.subr.bf16.mxu0 0
      %725 = vmatpush2.bf16.msra.mxu0 0
      %726 = vmatprep.mubr.bf16.mxu0 0
      %727 = vmatmul.mubr.bf16.gmra.mxu0 %v620
      %v728 = vpop.f32.mrf.mxu0
      %v729 = vadd.f32 %v644, %v728
      %v730 = vpop.f32.mrf.mxu0
      %v731 = vpop.f32.mrf.mxu0
      %v732 = vadd.f32 %v644, %v731
      %v733 = vpop.f32.mrf.mxu0
      %734 = vmatprep.mubr.bf16.mxu0 0
      %735 = vmatmul.mubr.bf16.gmra.mxu0 %v621
      %v736 = vpop.f32.mrf.mxu0
      %v737 = vadd.f32 %v644, %v736
      %v738 = vpop.f32.mrf.mxu0
      %v739 = vpop.f32.mrf.mxu0
      %v740 = vadd.f32 %v644, %v739
      %v741 = vpop.f32.mrf.mxu0
      %742 = vmatprep.mubr.bf16.mxu0 0
      %743 = vmatmul.mubr.bf16.gmra.mxu0 %v622
      %v744 = vpop.f32.mrf.mxu0
      %v745 = vadd.f32 %v644, %v744
      %v746 = vpop.f32.mrf.mxu0
      %v747 = vpop.f32.mrf.mxu0
      %v748 = vpop.f32.mrf.mxu0
      %749 = vdwg.mxu0
      %v750 = vxor.u32 %v729, 2147483648
      %v751 = vxor.u32 %v732, 2147483648
      %v752 = vxor.u32 %v737, 2147483648
      %v753 = vxor.u32 %v740, 2147483648
      %v754 = vxor.u32 %v745, 2147483648
      %v755 = vmul.f32 %v750, 1.442695
      %v756 = vpow.pop %v755
      %v757 = vmul.f32 %v751, 1.442695
      %v758 = vpow.pop %v757
      %v759 = vmul.f32 %v752, 1.442695
      %v760 = vpow.pop %v759
      %v761 = vmul.f32 %v753, 1.442695
      %v762 = vpow.pop %v761
      %v763 = vmul.f32 %v754, 1.442695
      %v764 = vpow.pop %v763
      %v765 = vadd.f32 %v756, 1.0
      %v766 = vadd.f32 %v758, 1.0
      %v767 = vadd.f32 %v760, 1.0
      %v768 = vadd.f32 %v762, 1.0
      %v769 = vadd.f32 %v764, 1.0
      %v770 = vrcp.pop %v765
      %v771 = vmul.f32 1.0, %v770
      %v772 = vrcp.pop %v766
      %v773 = vmul.f32 1.0, %v772
      %v774 = vrcp.pop %v767
      %v775 = vmul.f32 1.0, %v774
      %v776 = vrcp.pop %v768
      %v777 = vmul.f32 1.0, %v776
      %v778 = vrcp.pop %v769
      %v779 = vmul.f32 1.0, %v778
      %v780 = vmul.f32 %v729, %v771
      %v781 = vmul.f32 %v732, %v773
      %v782 = vmul.f32 %v737, %v775
      %v783 = vmul.f32 %v740, %v777
      %v784 = vmul.f32 %v745, %v779
      %s785 = smul.u32 %s28, 32
      %s786 = ssub.s32 %s785, 1
      %v787 = vlaneseq
      %v788 = vshrl.u32 %v787, 7
      %v789 = vadd.s32 %v788, 8
      %v790 = vadd.s32 %v788, 16
      %v791 = vadd.s32 %v788, 24
      %v792 = vadd.s32 %v788, 32
      %v793 = vstv %s786
      %v794 = vadd.s32 %v793, %v788
      %v795 = vadd.s32 %v793, %v789
      %v796 = vadd.s32 %v793, %v790
      %v797 = vadd.s32 %v793, %v791
      %v798 = vadd.s32 %v793, %v792
      %vm799 = vcmp.ge.s32.totalorder %v794, 0
      %vm800 = vcmp.ge.s32.totalorder %v795, 0
      %vm801 = vcmp.ge.s32.totalorder %v796, 0
      %vm802 = vcmp.ge.s32.totalorder %v797, 0
      %vm803 = vcmp.ge.s32.totalorder %v798, 0
      %vm804 = vcmp.lt.s32.totalorder %v794, 64
      %vm805 = vcmp.lt.s32.totalorder %v795, 64
      %vm806 = vcmp.lt.s32.totalorder %v796, 64
      %vm807 = vcmp.lt.s32.totalorder %v797, 64
      %vm808 = vcmp.lt.s32.totalorder %v798, 64
      %vm809 = vmand %vm799, %vm804
      %vm810 = vmand %vm800, %vm805
      %vm811 = vmand %vm801, %vm806
      %vm812 = vmand %vm802, %vm807
      %vm813 = vmand %vm803, %vm808
      %v814 = vsel %vm809, 1, 0
      %v815 = vsel %vm810, 1, 0
      %v816 = vsel %vm811, 1, 0
      %v817 = vsel %vm812, 1, 0
      %v818 = vsel %vm813, 1, 0
      %vm819 = vcmp.eq.s32.totalorder %v814, 1
      %vm820 = vcmp.eq.s32.totalorder %v815, 1
      %vm821 = vcmp.eq.s32.totalorder %v816, 1
      %vm822 = vcmp.eq.s32.totalorder %v817, 1
      %vm823 = vcmp.eq.s32.totalorder %v818, 1
      %v824 = vsel %vm819, %v780, 0.0
      %v825 = vsel %vm820, %v781, 0.0
      %v826 = vsel %vm821, %v782, 0.0
      %v827 = vsel %vm822, %v783, 0.0
      %v828 = vsel %vm823, %v784, 0.0
      %v829 = vld [vmem:[%s5] sm:$0x1]
      %v830 = vlaneseq
      %v831 = vshrl.u32 %v830, 7
      %v832 = vsub.s32 0, %v831
      %v833 = vrot.slane %v829, %v832
      %v834 = vmul.f32 %v824, %v833
      %v835 = vmul.f32 %v825, %v833
      %v836 = vmul.f32 %v826, %v833
      %v837 = vmul.f32 %v827, %v833
      %v838 = vld [vmem:[%s5 + $0x1] sm:$0x1]
      %v839 = vlaneseq
      %v840 = vshrl.u32 %v839, 7
      %v841 = vsub.s32 0, %v840
      %v842 = vrot.slane %v838, %v841
      %v843 = vmul.f32 %v824, %v842
      %v844 = vmul.f32 %v825, %v842
      %v845 = vmul.f32 %v826, %v842
      %v846 = vmul.f32 %v827, %v842
      %v847 = vmul.f32 %v828, %v842
      %vm853 = vcmask 1046528
      %v854 = vrot.slane %v843, 1
      %v855 = vrot.slane %v844, 1
      %v856 = vsel %vm853, %v854, %v855
      %v857 = vrot.slane %v845, 1
      %v858 = vsel %vm853, %v855, %v857
      %v859 = vrot.slane %v846, 1
      %v860 = vsel %vm853, %v857, %v859
      %v861 = vrot.slane %v847, 1
      %v862 = vsel %vm853, %v859, %v861
      %v867 = vadd.f32 %v834, %v856
      %v868 = vadd.f32 %v835, %v858
      %v869 = vadd.f32 %v836, %v860
      %v870 = vadd.f32 %v837, %v862
      %v871 = vld [vmem:[%s5 + $0x2] sm:$0x1]
      %v872 = vlaneseq
      %v873 = vshrl.u32 %v872, 7
      %v874 = vsub.s32 0, %v873
      %v875 = vrot.slane %v871, %v874
      %v876 = vmul.f32 %v824, %v875
      %v877 = vmul.f32 %v825, %v875
      %v878 = vmul.f32 %v826, %v875
      %v879 = vmul.f32 %v827, %v875
      %v880 = vmul.f32 %v828, %v875
      %vm886 = vcmask 1045504
      %v887 = vrot.slane %v876, 2
      %v888 = vrot.slane %v877, 2
      %v889 = vsel %vm886, %v887, %v888
      %v890 = vrot.slane %v878, 2
      %v891 = vsel %vm886, %v888, %v890
      %v892 = vrot.slane %v879, 2
      %v893 = vsel %vm886, %v890, %v892
      %v894 = vrot.slane %v880, 2
      %v895 = vsel %vm886, %v892, %v894
      %v900 = vadd.f32 %v867, %v889
      %v901 = vadd.f32 %v868, %v891
      %v902 = vadd.f32 %v869, %v893
      %v903 = vadd.f32 %v870, %v895
      %v904 = vld [vmem:[%s6] sm:$0x1]
      %v906 = vlaneseq
      %v907 = vshrl.u32 %v906, 7
      %v908 = vsub.s32 0, %v907
      %v909 = vrot.slane %v904, %v908
      %v911 = vadd.f32 %v900, %v909
      %v912 = vadd.f32 %v901, %v909
      %v913 = vadd.f32 %v902, %v909
      %v914 = vadd.f32 %v903, %v909
      %v915 = vxor.u32 %v911, 2147483648
      %v916 = vxor.u32 %v912, 2147483648
      %v917 = vxor.u32 %v913, 2147483648
      %v918 = vxor.u32 %v914, 2147483648
      %v919 = vmul.f32 %v915, 1.442695
      %v920 = vpow.pop %v919
      %v921 = vmul.f32 %v916, 1.442695
      %v922 = vpow.pop %v921
      %v923 = vmul.f32 %v917, 1.442695
      %v924 = vpow.pop %v923
      %v925 = vmul.f32 %v918, 1.442695
      %v926 = vpow.pop %v925
      %v927 = vadd.f32 %v920, 1.0
      %v928 = vadd.f32 %v922, 1.0
      %v929 = vadd.f32 %v924, 1.0
      %v930 = vadd.f32 %v926, 1.0
      %v931 = vrcp.pop %v927
      %v932 = vmul.f32 1.0, %v931
      %v933 = vrcp.pop %v928
      %v934 = vmul.f32 1.0, %v933
      %v935 = vrcp.pop %v929
      %v936 = vmul.f32 1.0, %v935
      %v937 = vrcp.pop %v930
      %v938 = vmul.f32 1.0, %v937
      %v939 = vmul.f32 %v911, %v932
      %v940 = vmul.f32 %v912, %v934
      %v941 = vmul.f32 %v913, %v936
      %v942 = vmul.f32 %v914, %v938
      %v943 = vld [vmem:[%s452] sm:$0x1]
      %v945 = vlaneseq
      %v946 = vshrl.u32 %v945, 7
      %v947 = vsub.s32 0, %v946
      %v948 = vrot.slane %v943, %v947
      %v950 = vmul.f32 %v939, %v948
      %v951 = vmul.f32 %v940, %v948
      %v952 = vmul.f32 %v941, %v948
      %v953 = vmul.f32 %v942, %v948
      %v954 = vpack.c.bf16 %v951, %v950
      %v955 = vpack.c.bf16 %v953, %v952
      %v956 = vld [vmem:[%s8] sm:$0xf]
      %v957 = vld [vmem:[%s8 + $0x4] sm:$0xf]
      %v958 = vld [vmem:[%s8 + $0x8] sm:$0xf]
      %v959 = vld [vmem:[%s8 + $0xc] sm:$0xf]
      %v960 = vld [vmem:[%s8 + $0x10] sm:$0xf]
      %v961 = vld [vmem:[%s8 + $0x14] sm:$0xf]
      %v962 = vld [vmem:[%s8 + $0x18] sm:$0xf]
      %v963 = vld [vmem:[%s8 + $0x1c] sm:$0xf]
      %v964 = vld [vmem:[%s8 + $0x20] sm:$0xf]
      %v965 = vld [vmem:[%s8 + $0x24] sm:$0xf]
      %v966 = vld [vmem:[%s8 + $0x28] sm:$0xf]
      %v967 = vld [vmem:[%s8 + $0x2c] sm:$0xf]
      %v968 = vld [vmem:[%s8 + $0x30] sm:$0xf]
      %v969 = vld [vmem:[%s8 + $0x34] sm:$0xf]
      %v970 = vld [vmem:[%s8 + $0x38] sm:$0xf]
      %v971 = vld [vmem:[%s8 + $0x3c] sm:$0xf]
      %v972 = vld [vmem:[%s9] sm:$0x1]
      %v974 = vlaneseq
      %v975 = vshrl.u32 %v974, 7
      %v976 = vsub.s32 0, %v975
      %v977 = vrot.slane %v972, %v976
      %v995 = vunpack.c.l.b16 %v956
      %v996 = vunpack.c.l.b16 %v957
      %v997 = vunpack.c.l.b16 %v958
      %v998 = vunpack.c.l.b16 %v959
      %v999 = vunpack.c.l.b16 %v960
      %v1000 = vunpack.c.l.b16 %v961
      %v1001 = vunpack.c.l.b16 %v962
      %v1002 = vunpack.c.l.b16 %v963
      %v1003 = vunpack.c.l.b16 %v964
      %v1004 = vunpack.c.l.b16 %v965
      %v1005 = vunpack.c.l.b16 %v966
      %v1006 = vunpack.c.l.b16 %v967
      %v1007 = vunpack.c.l.b16 %v968
      %v1008 = vunpack.c.l.b16 %v969
      %v1009 = vunpack.c.l.b16 %v970
      %v1010 = vunpack.c.l.b16 %v971
      %v1011 = vpack.c.b16 %v996, %v995
      %v1012 = vpack.c.b16 %v998, %v997
      %v1013 = vpack.c.b16 %v1000, %v999
      %v1014 = vpack.c.b16 %v1002, %v1001
      %v1015 = vpack.c.b16 %v1004, %v1003
      %v1016 = vpack.c.b16 %v1006, %v1005
      %v1017 = vpack.c.b16 %v1008, %v1007
      %v1018 = vpack.c.b16 %v1010, %v1009
      %1027 = vmatprep.subr.bf16.mxu0 0
      %1028 = vmatpush1.bf16.msra.mxu0 %v1018
      %1029 = vmatprep.subr.bf16.mxu0 0
      %1030 = vmatpush1.bf16.msra.mxu0 %v1017
      %1031 = vmatprep.subr.bf16.mxu0 0
      %1032 = vmatpush1.bf16.msra.mxu0 %v1016
      %1033 = vmatprep.subr.bf16.mxu0 0
      %1034 = vmatpush1.bf16.msra.mxu0 %v1015
      %1035 = vmatprep.subr.bf16.mxu0 0
      %1036 = vmatpush1.bf16.msra.mxu0 %v1014
      %1037 = vmatprep.subr.bf16.mxu0 0
      %1038 = vmatpush1.bf16.msra.mxu0 %v1013
      %1039 = vmatprep.subr.bf16.mxu0 0
      %1040 = vmatpush1.bf16.msra.mxu0 %v1012
      %1041 = vmatprep.subr.bf16.mxu0 0
      %1042 = vmatpush1.bf16.msra.mxu0 %v1011
      %1043 = vmatprep.subr.bf16.mxu0 0
      %1044 = vmatpush2.bf16.msra.mxu0 0
      %1045 = vmatprep.subr.bf16.mxu0 0
      %1046 = vmatpush2.bf16.msra.mxu0 0
      %1047 = vmatprep.subr.bf16.mxu0 0
      %1048 = vmatpush2.bf16.msra.mxu0 0
      %1049 = vmatprep.subr.bf16.mxu0 0
      %1050 = vmatpush2.bf16.msra.mxu0 0
      %1051 = vmatprep.subr.bf16.mxu0 0
      %1052 = vmatpush2.bf16.msra.mxu0 0
      %1053 = vmatprep.subr.bf16.mxu0 0
      %1054 = vmatpush2.bf16.msra.mxu0 0
      %1055 = vmatprep.subr.bf16.mxu0 0
      %1056 = vmatpush2.bf16.msra.mxu0 0
      %1057 = vmatprep.subr.bf16.mxu0 0
      %1058 = vmatpush2.bf16.msra.mxu0 0
      %1059 = vmatprep.mubr.bf16.mxu0 0
      %1060 = vmatmul.mubr.bf16.gmra.mxu0 %v954
      %v1061 = vpop.f32.mrf.mxu0
      %v1062 = vadd.f32 %v977, %v1061
      %v1063 = vpop.f32.mrf.mxu0
      %v1064 = vpop.f32.mrf.mxu0
      %v1065 = vadd.f32 %v977, %v1064
      %v1066 = vpop.f32.mrf.mxu0
      %1067 = vmatprep.mubr.bf16.mxu0 0
      %1068 = vmatmul.mubr.bf16.gmra.mxu0 %v955
      %v1069 = vpop.f32.mrf.mxu0
      %v1070 = vadd.f32 %v977, %v1069
      %v1071 = vpop.f32.mrf.mxu0
      %v1072 = vpop.f32.mrf.mxu0
      %v1073 = vadd.f32 %v977, %v1072
      %v1074 = vpop.f32.mrf.mxu0
      %1075 = vdwg.mxu0
      %v1081 = vrot.slane %v615, 1
      %v1082 = vrot.slane %v616, 1
      %v1083 = vsel %vm853, %v1081, %v1082
      %v1084 = vrot.slane %v617, 1
      %v1085 = vsel %vm853, %v1082, %v1084
      %v1086 = vrot.slane %v618, 1
      %v1087 = vsel %vm853, %v1084, %v1086
      %v1088 = vrot.slane %v619, 1
      %v1089 = vsel %vm853, %v1086, %v1088
      %v1094 = vadd.f32 %v1062, %v1083
      %v1095 = vadd.f32 %v1065, %v1085
      %v1096 = vadd.f32 %v1070, %v1087
      %v1097 = vadd.f32 %v1073, %v1089
      %v1098 = vpack.c.bf16 %v1095, %v1094
      %v1099 = vpack.c.bf16 %v1097, %v1096
      %v1100 = vld [vmem:[%s10] sm:$0xf]
      %v1101 = vld [vmem:[%s10 + $0x4] sm:$0xf]
      %v1102 = vld [vmem:[%s10 + $0x8] sm:$0xf]
      %v1103 = vld [vmem:[%s10 + $0xc] sm:$0xf]
      %v1104 = vld [vmem:[%s10 + $0x10] sm:$0xf]
      %v1105 = vld [vmem:[%s10 + $0x14] sm:$0xf]
      %v1106 = vld [vmem:[%s10 + $0x18] sm:$0xf]
      %v1107 = vld [vmem:[%s10 + $0x1c] sm:$0xf]
      %v1108 = vld [vmem:[%s10 + $0x20] sm:$0xf]
      %v1109 = vld [vmem:[%s10 + $0x24] sm:$0xf]
      %v1110 = vld [vmem:[%s10 + $0x28] sm:$0xf]
      %v1111 = vld [vmem:[%s10 + $0x2c] sm:$0xf]
      %v1112 = vld [vmem:[%s10 + $0x30] sm:$0xf]
      %v1113 = vld [vmem:[%s10 + $0x34] sm:$0xf]
      %v1114 = vld [vmem:[%s10 + $0x38] sm:$0xf]
      %v1115 = vld [vmem:[%s10 + $0x3c] sm:$0xf]
      %v1116 = vld [vmem:[%s11] sm:$0x1]
      %v1118 = vlaneseq
      %v1119 = vshrl.u32 %v1118, 7
      %v1120 = vsub.s32 0, %v1119
      %v1121 = vrot.slane %v1116, %v1120
      %v1139 = vunpack.c.l.b16 %v1100
      %v1140 = vunpack.c.l.b16 %v1101
      %v1141 = vunpack.c.l.b16 %v1102
      %v1142 = vunpack.c.l.b16 %v1103
      %v1143 = vunpack.c.l.b16 %v1104
      %v1144 = vunpack.c.l.b16 %v1105
      %v1145 = vunpack.c.l.b16 %v1106
      %v1146 = vunpack.c.l.b16 %v1107
      %v1147 = vunpack.c.l.b16 %v1108
      %v1148 = vunpack.c.l.b16 %v1109
      %v1149 = vunpack.c.l.b16 %v1110
      %v1150 = vunpack.c.l.b16 %v1111
      %v1151 = vunpack.c.l.b16 %v1112
      %v1152 = vunpack.c.l.b16 %v1113
      %v1153 = vunpack.c.l.b16 %v1114
      %v1154 = vunpack.c.l.b16 %v1115
      %v1155 = vpack.c.b16 %v1140, %v1139
      %v1156 = vpack.c.b16 %v1142, %v1141
      %v1157 = vpack.c.b16 %v1144, %v1143
      %v1158 = vpack.c.b16 %v1146, %v1145
      %v1159 = vpack.c.b16 %v1148, %v1147
      %v1160 = vpack.c.b16 %v1150, %v1149
      %v1161 = vpack.c.b16 %v1152, %v1151
      %v1162 = vpack.c.b16 %v1154, %v1153
      %1171 = vmatprep.subr.bf16.mxu0 0
      %1172 = vmatpush1.bf16.msra.mxu0 %v1162
      %1173 = vmatprep.subr.bf16.mxu0 0
      %1174 = vmatpush1.bf16.msra.mxu0 %v1161
      %1175 = vmatprep.subr.bf16.mxu0 0
      %1176 = vmatpush1.bf16.msra.mxu0 %v1160
      %1177 = vmatprep.subr.bf16.mxu0 0
      %1178 = vmatpush1.bf16.msra.mxu0 %v1159
      %1179 = vmatprep.subr.bf16.mxu0 0
      %1180 = vmatpush1.bf16.msra.mxu0 %v1158
      %1181 = vmatprep.subr.bf16.mxu0 0
      %1182 = vmatpush1.bf16.msra.mxu0 %v1157
      %1183 = vmatprep.subr.bf16.mxu0 0
      %1184 = vmatpush1.bf16.msra.mxu0 %v1156
      %1185 = vmatprep.subr.bf16.mxu0 0
      %1186 = vmatpush1.bf16.msra.mxu0 %v1155
      %1187 = vmatprep.subr.bf16.mxu0 0
      %1188 = vmatpush2.bf16.msra.mxu0 0
      %1189 = vmatprep.subr.bf16.mxu0 0
      %1190 = vmatpush2.bf16.msra.mxu0 0
      %1191 = vmatprep.subr.bf16.mxu0 0
      %1192 = vmatpush2.bf16.msra.mxu0 0
      %1193 = vmatprep.subr.bf16.mxu0 0
      %1194 = vmatpush2.bf16.msra.mxu0 0
      %1195 = vmatprep.subr.bf16.mxu0 0
      %1196 = vmatpush2.bf16.msra.mxu0 0
      %1197 = vmatprep.subr.bf16.mxu0 0
      %1198 = vmatpush2.bf16.msra.mxu0 0
      %1199 = vmatprep.subr.bf16.mxu0 0
      %1200 = vmatpush2.bf16.msra.mxu0 0
      %1201 = vmatprep.subr.bf16.mxu0 0
      %1202 = vmatpush2.bf16.msra.mxu0 0
      %1203 = vmatprep.mubr.bf16.mxu0 0
      %1204 = vmatmul.mubr.bf16.gmra.mxu0 %v1098
      %v1205 = vpop.f32.mrf.mxu0
      %v1206 = vadd.f32 %v1121, %v1205
      %v1207 = vpop.f32.mrf.mxu0
      %v1208 = vpop.f32.mrf.mxu0
      %v1209 = vadd.f32 %v1121, %v1208
      %v1210 = vpop.f32.mrf.mxu0
      %1211 = vmatprep.mubr.bf16.mxu0 0
      %1212 = vmatmul.mubr.bf16.gmra.mxu0 %v1099
      %v1213 = vpop.f32.mrf.mxu0
      %v1214 = vadd.f32 %v1121, %v1213
      %v1215 = vpop.f32.mrf.mxu0
      %v1216 = vpop.f32.mrf.mxu0
      %v1217 = vadd.f32 %v1121, %v1216
      %v1218 = vpop.f32.mrf.mxu0
      %1219 = vdwg.mxu0
      %v1220 = vxor.u32 %v1206, 2147483648
      %v1221 = vxor.u32 %v1209, 2147483648
      %v1222 = vxor.u32 %v1214, 2147483648
      %v1223 = vxor.u32 %v1217, 2147483648
      %v1224 = vmul.f32 %v1220, 1.442695
      %v1225 = vpow.pop %v1224
      %v1226 = vmul.f32 %v1221, 1.442695
      %v1227 = vpow.pop %v1226
      %v1228 = vmul.f32 %v1222, 1.442695
      %v1229 = vpow.pop %v1228
      %v1230 = vmul.f32 %v1223, 1.442695
      %v1231 = vpow.pop %v1230
      %v1232 = vadd.f32 %v1225, 1.0
      %v1233 = vadd.f32 %v1227, 1.0
      %v1234 = vadd.f32 %v1229, 1.0
      %v1235 = vadd.f32 %v1231, 1.0
      %v1236 = vrcp.pop %v1232
      %v1237 = vmul.f32 1.0, %v1236
      %v1238 = vrcp.pop %v1233
      %v1239 = vmul.f32 1.0, %v1238
      %v1240 = vrcp.pop %v1234
      %v1241 = vmul.f32 1.0, %v1240
      %v1242 = vrcp.pop %v1235
      %v1243 = vmul.f32 1.0, %v1242
      %v1244 = vmul.f32 %v1206, %v1237
      %v1245 = vmul.f32 %v1209, %v1239
      %v1246 = vmul.f32 %v1214, %v1241
      %v1247 = vmul.f32 %v1217, %v1243
      %v1248 = vadd.f32 %v1244, %v1245
      %v1249 = vadd.f32 %v1248, %v1246
      %v1250 = vadd.f32 %v1249, %v1247
      %v1251 = vrot.slane %v1250, 4
      %v1252 = vadd.f32 %v1250, %v1251
      %v1253 = vrot.slane %v1252, 2
      %v1254 = vadd.f32 %v1252, %v1253
      %v1255 = vrot.slane %v1254, 1
      %v1256 = vadd.f32 %v1254, %v1255
      %1257 = vst [vmem:[%s459] sm:$0x1] %v1256
      %p1258 = scmp.lt.s32.totalorder %s28, 1
      %s1259 = scalar_select %p1258, %s28, 1
      %p1260 = scmp.lt.s32.totalorder %s27, 1
      %s1261 = scalar_select %p1260, %s27, 1
      %s1262 = smul.addr %s1259, 2
      %s1263 = sadd.s32 %s1261, %s1262
      %s1264 = scalar_lea.vmem %s12, %s1263
      // Predicated region
      $region69: #{efficientnet_forward.3} parent=67 // pred_check
        %p1265 = pneg %p319
      $region70: #{efficientnet_forward.3} parent=67 // pred_check_branch
        %1267 = sbr.rel (%p1265) target = $region72
      $region71: #{efficientnet_forward.3} parent=67 // pred_region
        _
      $region72: #{efficientnet_forward.3} parent=67 // pred_fallthru
        _
    $region68: #{efficientnet_forward.3} parent=5 // pred_fallthru
      _
    %p1268 = scmp.le.s32.totalorder 2, %s18
    // Predicated region
    $region73: #{efficientnet_forward.3} parent=5 // pred_check
      %p1269 = pneg %p1268
    $region74: #{efficientnet_forward.3} parent=5 // pred_check_branch
      %1271 = sbr.rel (%p1269) target = $region76
    $region75: #{efficientnet_forward.3} parent=5 // pred_region
      %s1272 = ssub.s32 %s18, 2
      // Predicated region
      $region77: #{efficientnet_forward.3} parent=75 // pred_check
        %p1273 = pneg %p325
      $region78: #{efficientnet_forward.3} parent=75 // pred_check_branch
        %1275 = sbr.rel (%p1273) target = $region80
      $region79: #{efficientnet_forward.3} parent=75 // pred_region
        %p1276 = scmp.lt.s32.totalorder %s30, 1
        %s1277 = scalar_select %p1276, %s30, 1
        %p1278 = scmp.lt.s32.totalorder %s29, 1
        %s1279 = scalar_select %p1278, %s29, 1
        %s1280 = smul.addr %s1277, 2
        %s1281 = sadd.s32 %s1279, %s1280
        %s1282 = scalar_lea.vmem %s12, %s1281
      $region80: #{efficientnet_forward.3} parent=75 // pred_fallthru
        _
    $region76: #{efficientnet_forward.3} parent=5 // pred_fallthru
      _
  $region6: #{efficientnet_forward.3} parent=0 // loop_footer
    %s22 = sadd.s32 1, %s18
  $region7: #{efficientnet_forward.3} parent=0 // loop_footer_branch
    %17 = sbr.rel target = $region3
  $region8: #{efficientnet_forward.3} parent=0 // loop_exit
    _

</llo_original>
